<compile_context>
chip_gen: v7x
topology: tpu7x:2x2x1
jax: 0.10.0
libtpu: 0.0.40
codegen_flags: <defaults>
</compile_context>

<pallas_src>
import jax
import jax.numpy as jnp
from jax.experimental import pallas as pl
from jax.experimental.pallas import tpu as pltpu  # noqa: F401  (kept for TPU-specific params if needed)

HIDDEN = 512          # self.hidden_size
MID = HIDDEN // 2     # 256
N_CLS = 5             # len(self.binary_classifiers)
BN_EPS = 1e-5
D_IRT = 1.702         # default D of EduCDM irt3pl


# --------------------------- in-kernel math helpers ---------------------------

def _sig_fast(z):
    # sigmoid with the divide on the EUP approximate-reciprocal path
    return pl.reciprocal(1.0 + jnp.exp(-z), approx=True)


def _softplus(x):
    # numerically stable softplus using only exp/log/abs/max (Mosaic-friendly)
    return jnp.maximum(x, 0.0) + jnp.log(1.0 + jnp.exp(-jnp.abs(x)))


def _mlp_tail(h, w2_ref, b2_ref, w3t_ref, b3_ref):
    # Linear(512->256)+BN(folded)+ReLU on the MXU, then the N=1 output layer as a
    # VPU multiply + XLU lane-reduce (avoids a degenerate N=1 matmul).
    m = jnp.dot(h, w2_ref[...], preferred_element_type=jnp.float32) + b2_ref[...]
    m = jnp.maximum(m, 0.0)
    return jnp.sum(m * w3t_ref[...], axis=-1, keepdims=True) + b3_ref[...]


# --------------------------- fused forward kernel ---------------------------

def _fused_kernel(x_ref,
                  w1s_ref, b1s_ref, w2s_ref, b2s_ref, w3s_ref, b3s_ref,
                  w1c_ref, b1c_ref, w2c_ref, b2c_ref, w3c_ref, b3c_ref,
                  w1d_ref, b1d_ref, w2d_ref, b2d_ref, w3d_ref, b3d_ref,
                  w1b_ref, b1b_ref, w2b_ref, b2b_ref,
                  o_ref):
    B = o_ref.shape[0]
    x = x_ref[...]                      # (B+1, 8): rows 0..B-1 = samples, row B = con row
    theta_col = x[:, 0:1]
    sens_col = x[:, 1:2]

    # mlp_sensitive over the B sample rows + the 1 con row.
    # First layer is K=1 -> pure VPU outer product (broadcast multiply), no MXU.
    h = jnp.maximum(sens_col * w1s_ref[...] + b1s_ref[...], 0.0)          # (B+1, 512)
    s_feat = _mlp_tail(h, w2s_ref, b2s_ref, w3s_ref, b3s_ref)             # (B+1, 1)

    # mlp_combine on [theta, sens_feat] (K=2 first layer as two broadcast multiplies).
    w1c = w1c_ref[...]                                                    # (2, 512)
    h = jnp.maximum(theta_col * w1c[0:1, :] + s_feat * w1c[1:2, :] + b1c_ref[...], 0.0)
    uf_all = _mlp_tail(h, w2c_ref, b2c_ref, w3c_ref, b3c_ref)             # (B+1, 1)

    # mlp_sensitive_dense on sens_feat.
    h = jnp.maximum(s_feat * w1d_ref[...] + b1d_ref[...], 0.0)
    ud_all = _mlp_tail(h, w2d_ref, b2d_ref, w3d_ref, b3d_ref)             # (B+1, 1)

    uf_feat = uf_all[:B, :]                                               # (B, 1)
    ud_feat = ud_all[:B, :]                                               # (B, 1)
    con_uf_feat = uf_all[B:B + 1, :]                                      # (1, 1) batch-invariant

    alpha = _sig_fast(x[:B, 2:3])
    beta = _sig_fast(x[:B, 3:4])
    a = _softplus(x[:B, 4:5])           # a_range is None -> softplus
    b = _sig_fast(x[:B, 5:6])           # value_range is None -> plain sigmoid
    c = _sig_fast(x[:B, 6:7])

    Uf = _sig_fast(uf_feat)
    Ud = _sig_fast(ud_feat)
    con_Uf = _sig_fast(con_uf_feat)
    theta = _sig_fast((1.0 - alpha) * Uf + alpha * Ud)
    con_theta = _sig_fast((1.0 - alpha) * con_Uf + alpha * Ud)
    debias_theta = _sig_fast(theta - beta * con_theta)
    # irt3pl: c + (1 - c) / (1 + exp(-D * a * (theta - b)))
    o_ref[:, 0:1] = c + (1.0 - c) * _sig_fast(D_IRT * a * (debias_theta - b))

    # 5 binary classifiers stacked lane-dense: Linear(1,512)+BN+ReLU -> Linear(512,1) -> Sigmoid
    hb = jnp.maximum(uf_feat * w1b_ref[...] + b1b_ref[...], 0.0)          # (B, 5*512)
    t = hb * w2b_ref[...]                                                 # (B, 5*512)
    b2b = b2b_ref[...]                                                    # (1, 5)
    for k in range(N_CLS):
        logit = jnp.sum(t[:, k * HIDDEN:(k + 1) * HIDDEN], axis=-1, keepdims=True) + b2b[:, k:k + 1]
        o_ref[:, 1 + k:2 + k] = _sig_fast(logit)


# --------------------------- pallas_call wrapper ---------------------------

def _full_spec(shape):
    nd = len(shape)
    return pl.BlockSpec(shape, lambda i, _nd=nd: (0,) * _nd)


def irtnet_forward(params, user, item, sensitive):
    """IRTNet.forward, train_mode=False, mode=None, sensitive_name != 'escs'."""
    B = user.shape[0]
    # Host side: embedding gathers + packing all per-row scalars lane-dense into (B+1, 8).
    rows = jnp.concatenate([
        params['theta'][user], params['fisced'][sensitive],
        params['alpha'][user], params['beta'][user],
        params['a'][item], params['b'][item], params['c'][item],
        jnp.zeros((B, 1), jnp.float32)], axis=-1)                          # (B, 8)
    # Batch-invariant "con" row (means of the embedding tables), computed once.
    con_row = jnp.concatenate([
        jnp.mean(params['theta']).reshape(1, 1),
        jnp.mean(params['fisced']).reshape(1, 1),
        jnp.zeros((1, 6), jnp.float32)], axis=-1)                          # (1, 8)
    x_in = jnp.concatenate([rows, con_row], axis=0)                        # (B+1, 8)

    args = (x_in,
            *params['mlp_sensitive_folded'],
            *params['mlp_combine_folded'],
            *params['mlp_sensitive_dense_folded'],
            *params['bin_stacked'])

    out = pl.pallas_call(
        _fused_kernel,
        grid=(1,),
        in_specs=[_full_spec(a.shape) for a in args],
        out_specs=_full_spec((B, 1 + N_CLS)),
        out_shape=jax.ShapeDtypeStruct((B, 1 + N_CLS), jnp.float32),
    )(*args)

    pred = out[:, 0]                 # (B,)
    binary = out[:, 1:].T            # (5, B)
    return pred, binary


# --------------------------- parameter setup (deterministic, synthetic) ---------------------------

def _xavier(key, fan_in, fan_out):
    std = (2.0 / (fan_in + fan_out)) ** 0.5
    return std * jax.random.normal(key, (fan_in, fan_out), jnp.float32)


def _bn_init(key, n):
    k1, k2, k3, k4 = jax.random.split(key, 4)
    gamma = 1.0 + 0.1 * jax.random.normal(k1, (n,), jnp.float32)
    beta = 0.1 * jax.random.normal(k2, (n,), jnp.float32)
    rmean = 0.1 * jax.random.normal(k3, (n,), jnp.float32)
    rvar = 1.0 + 0.1 * jnp.abs(jax.random.normal(k4, (n,), jnp.float32))
    return (gamma, beta, rmean, rvar)


def _fold_linear_bn(w, b, bn):
    # eval-mode BN folded exactly into the preceding Linear:  y = x@W' + b'
    g, be, rm, rv = bn
    s = g / jnp.sqrt(rv + BN_EPS)
    return w * s[None, :], (b * s + be - rm * s)[None, :]


def _init_mlp3(key, din, dout):
    ks = jax.random.split(key, 9)
    return dict(
        w1=_xavier(ks[0], din, HIDDEN), b1=0.01 * jax.random.normal(ks[1], (HIDDEN,), jnp.float32),
        bn1=_bn_init(ks[2], HIDDEN),
        w2=_xavier(ks[3], HIDDEN, MID), b2=0.01 * jax.random.normal(ks[4], (MID,), jnp.float32),
        bn2=_bn_init(ks[5], MID),
        w3=_xavier(ks[6], MID, dout), b3=0.01 * jax.random.normal(ks[7], (dout,), jnp.float32),
        bn3=_bn_init(ks[8], dout),
    )


def _fold_mlp3(p):
    w1, b1 = _fold_linear_bn(p['w1'], p['b1'], p['bn1'])   # (din,512), (1,512)
    w2, b2 = _fold_linear_bn(p['w2'], p['b2'], p['bn2'])   # (512,256), (1,256)
    w3, b3 = _fold_linear_bn(p['w3'], p['b3'], p['bn3'])   # (256,1),   (1,1)
    # w3 passed transposed so the last layer is a VPU multiply + lane reduce in-kernel.
    return (w1, b1, w2, b2, w3.T, b3)


def _init_bincls(key):
    raw = []
    for k in jax.random.split(key, N_CLS):
        k1, k2, k3, k4, k5 = jax.random.split(k, 5)
        raw.append(dict(
            w1=_xavier(k1, 1, HIDDEN), b1=0.01 * jax.random.normal(k2, (HIDDEN,), jnp.float32),
            bn1=_bn_init(k3, HIDDEN),
            w2=_xavier(k4, HIDDEN, 1), b2=0.01 * jax.random.normal(k5, (1,), jnp.float32),
        ))
    w1s, b1s, w2s, b2s = [], [], [], []
    for p in raw:
        w1, b1 = _fold_linear_bn(p['w1'], p['b1'], p['bn1'])
        w1s.append(w1)                # (1, 512)
        b1s.append(b1)                # (1, 512)
        w2s.append(p['w2'].T)         # (1, 512)   (no BN on the second layer)
        b2s.append(p['b2'][None, :])  # (1, 1)
    stacked = (jnp.concatenate(w1s, axis=-1),   # (1, 5*512)
               jnp.concatenate(b1s, axis=-1),   # (1, 5*512)
               jnp.concatenate(w2s, axis=-1),   # (1, 5*512)
               jnp.concatenate(b2s, axis=-1))   # (1, 5)
    return raw, stacked


def init_params(key, user_num, item_num):
    ks = jax.random.split(key, 12)
    params = dict(
        theta=_xavier(ks[0], user_num, 1),   # nn.Embedding(user_num, 1)
        fisced=_xavier(ks[1], 6, 1),         # nn.Embedding(6, 1)
        a=_xavier(ks[2], item_num, 1),
        b=_xavier(ks[3], item_num, 1),
        c=_xavier(ks[4], item_num, 1),
        alpha=_xavier(ks[5], user_num, 1),
        beta=_xavier(ks[6], user_num, 1),
        mlp_sensitive=_init_mlp3(ks[7], 1, 1),
        mlp_combine=_init_mlp3(ks[8], 2, 1),
        mlp_sensitive_dense=_init_mlp3(ks[9], 1, 1),
    )
    raw_cls, stacked_cls = _init_bincls(ks[10])
    params['bin_raw'] = raw_cls
    params['bin_stacked'] = stacked_cls
    params['mlp_sensitive_folded'] = _fold_mlp3(params['mlp_sensitive'])
    params['mlp_combine_folded'] = _fold_mlp3(params['mlp_combine'])
    params['mlp_sensitive_dense_folded'] = _fold_mlp3(params['mlp_sensitive_dense'])
    return params


# --------------------------- pure-JAX reference (unfolded BN, exact math) ---------------------------

def _sig(x):
    return 1.0 / (1.0 + jnp.exp(-x))


def _bn_eval(x, bn):
    g, be, rm, rv = bn
    return (x - rm) / jnp.sqrt(rv + BN_EPS) * g + be


def _mlp3_ref(x, p):
    h = jnp.maximum(_bn_eval(x @ p['w1'] + p['b1'], p['bn1']), 0.0)
    h = jnp.maximum(_bn_eval(h @ p['w2'] + p['b2'], p['bn2']), 0.0)
    return _bn_eval(h @ p['w3'] + p['b3'], p['bn3'])


def reference_forward(params, user, item, sensitive):
    B = user.shape[0]
    theta_emb = params['theta'][user]
    sens_feat = _mlp3_ref(params['fisced'][sensitive], params['mlp_sensitive'])
    Uf_feat = _mlp3_ref(jnp.concatenate([theta_emb, sens_feat], -1), params['mlp_combine'])
    Ud_feat = _mlp3_ref(sens_feat, params['mlp_sensitive_dense'])
    con_theta0 = jnp.broadcast_to(jnp.mean(params['theta'], axis=0, keepdims=True), (B, 1))
    con_sens0 = jnp.broadcast_to(jnp.mean(params['fisced'], axis=0, keepdims=True), (B, 1))
    con_sens_feat = _mlp3_ref(con_sens0, params['mlp_sensitive'])
    con_Uf_feat = _mlp3_ref(jnp.concatenate([con_theta0, con_sens_feat], -1), params['mlp_combine'])

    alpha = _sig(params['alpha'][user])
    beta = _sig(params['beta'][user])
    Uf, Ud, con_Uf = _sig(Uf_feat), _sig(Ud_feat), _sig(con_Uf_feat)
    theta = _sig((1.0 - alpha) * Uf + alpha * Ud)
    con_theta = _sig((1.0 - alpha) * con_Uf + alpha * Ud)
    debias_theta = _sig(theta - beta * con_theta)
    a = jnp.maximum(params['a'][item], 0.0) + jnp.log(1.0 + jnp.exp(-jnp.abs(params['a'][item])))
    b = _sig(params['b'][item])
    c = _sig(params['c'][item])
    pred = c + (1.0 - c) / (1.0 + jnp.exp(-D_IRT * a * (debias_theta - b)))

    bins = []
    for p in params['bin_raw']:
        h = jnp.maximum(_bn_eval(Uf_feat @ p['w1'] + p['b1'], p['bn1']), 0.0)
        bins.append(_sig(h @ p['w2'] + p['b2']))
    return jnp.squeeze(pred, -1), jnp.squeeze(jnp.stack(bins, 0), -1)


# --------------------------- demo ---------------------------

if __name__ == "__main__":
    USER_NUM, ITEM_NUM, B = 32, 24, 8
    key = jax.random.PRNGKey(0)
    kp, ku, ki, ks = jax.random.split(key, 4)
    params = init_params(kp, USER_NUM, ITEM_NUM)
    user = jax.random.randint(ku, (B,), 0, USER_NUM)
    item = jax.random.randint(ki, (B,), 0, ITEM_NUM)
    sensitive = jax.random.randint(ks, (B,), 0, 6)   # fisced category ids (non-escs path)

    fwd = jax.jit(irtnet_forward)
    pred, binary_outputs = fwd(params, user, item, sensitive)
    jax.block_until_ready((pred, binary_outputs))

    pred_ref, bin_ref = reference_forward(params, user, item, sensitive)
    assert pred.shape == (B,) and binary_outputs.shape == (N_CLS, B)
    # tolerance slightly relaxed vs. exact-division version to cover the EUP
    # approximate-reciprocal (pl.reciprocal(approx=True)) used inside the kernel.
    TOL = 5e-3
    assert bool(jnp.allclose(pred, pred_ref, atol=TOL, rtol=TOL)), \
        float(jnp.max(jnp.abs(pred - pred_ref)))
    assert bool(jnp.allclose(binary_outputs, bin_ref, atol=TOL, rtol=TOL)), \
        float(jnp.max(jnp.abs(binary_outputs - bin_ref)))
    print("KERNEL_OK")
</pallas_src>

<mosaic_0001>
module attributes {stable_mosaic.version = 11 : i64} {
  func.func @_fused_kernel(%arg0: i32, %arg1: memref<9x8xf32, #tpu.memory_space<vmem>>, %arg2: memref<1x512xf32, #tpu.memory_space<vmem>>, %arg3: memref<1x512xf32, #tpu.memory_space<vmem>>, %arg4: memref<512x256xf32, #tpu.memory_space<vmem>>, %arg5: memref<1x256xf32, #tpu.memory_space<vmem>>, %arg6: memref<1x256xf32, #tpu.memory_space<vmem>>, %arg7: memref<1x1xf32, #tpu.memory_space<vmem>>, %arg8: memref<2x512xf32, #tpu.memory_space<vmem>>, %arg9: memref<1x512xf32, #tpu.memory_space<vmem>>, %arg10: memref<512x256xf32, #tpu.memory_space<vmem>>, %arg11: memref<1x256xf32, #tpu.memory_space<vmem>>, %arg12: memref<1x256xf32, #tpu.memory_space<vmem>>, %arg13: memref<1x1xf32, #tpu.memory_space<vmem>>, %arg14: memref<1x512xf32, #tpu.memory_space<vmem>>, %arg15: memref<1x512xf32, #tpu.memory_space<vmem>>, %arg16: memref<512x256xf32, #tpu.memory_space<vmem>>, %arg17: memref<1x256xf32, #tpu.memory_space<vmem>>, %arg18: memref<1x256xf32, #tpu.memory_space<vmem>>, %arg19: memref<1x1xf32, #tpu.memory_space<vmem>>, %arg20: memref<1x2560xf32, #tpu.memory_space<vmem>>, %arg21: memref<1x2560xf32, #tpu.memory_space<vmem>>, %arg22: memref<1x2560xf32, #tpu.memory_space<vmem>>, %arg23: memref<1x5xf32, #tpu.memory_space<vmem>>, %arg24: memref<8x6xf32, #tpu.memory_space<vmem>>) attributes {dimension_semantics = [#tpu.dimension_semantics<arbitrary>], iteration_bounds = array<i64: 1>, scalar_prefetch = 0 : i64, scratch_operands = 0 : i64, tpu.core_type = #tpu.core_type<tc>, window_params = [{pipeline_mode = #tpu.pipeline_mode<synchronous>, transform_indices = @transform_0, window_bounds = array<i64: 9, 8>}, {pipeline_mode = #tpu.pipeline_mode<synchronous>, transform_indices = @transform_1, window_bounds = array<i64: 1, 512>}, {pipeline_mode = #tpu.pipeline_mode<synchronous>, transform_indices = @transform_2, window_bounds = array<i64: 1, 512>}, {pipeline_mode = #tpu.pipeline_mode<synchronous>, transform_indices = @transform_3, window_bounds = array<i64: 512, 256>}, {pipeline_mode = #tpu.pipeline_mode<synchronous>, transform_indices = @transform_4, window_bounds = array<i64: 1, 256>}, {pipeline_mode = #tpu.pipeline_mode<synchronous>, transform_indices = @transform_5, window_bounds = array<i64: 1, 256>}, {pipeline_mode = #tpu.pipeline_mode<synchronous>, transform_indices = @transform_6, window_bounds = array<i64: 1, 1>}, {pipeline_mode = #tpu.pipeline_mode<synchronous>, transform_indices = @transform_7, window_bounds = array<i64: 2, 512>}, {pipeline_mode = #tpu.pipeline_mode<synchronous>, transform_indices = @transform_8, window_bounds = array<i64: 1, 512>}, {pipeline_mode = #tpu.pipeline_mode<synchronous>, transform_indices = @transform_9, window_bounds = array<i64: 512, 256>}, {pipeline_mode = #tpu.pipeline_mode<synchronous>, transform_indices = @transform_10, window_bounds = array<i64: 1, 256>}, {pipeline_mode = #tpu.pipeline_mode<synchronous>, transform_indices = @transform_11, window_bounds = array<i64: 1, 256>}, {pipeline_mode = #tpu.pipeline_mode<synchronous>, transform_indices = @transform_12, window_bounds = array<i64: 1, 1>}, {pipeline_mode = #tpu.pipeline_mode<synchronous>, transform_indices = @transform_13, window_bounds = array<i64: 1, 512>}, {pipeline_mode = #tpu.pipeline_mode<synchronous>, transform_indices = @transform_14, window_bounds = array<i64: 1, 512>}, {pipeline_mode = #tpu.pipeline_mode<synchronous>, transform_indices = @transform_15, window_bounds = array<i64: 512, 256>}, {pipeline_mode = #tpu.pipeline_mode<synchronous>, transform_indices = @transform_16, window_bounds = array<i64: 1, 256>}, {pipeline_mode = #tpu.pipeline_mode<synchronous>, transform_indices = @transform_17, window_bounds = array<i64: 1, 256>}, {pipeline_mode = #tpu.pipeline_mode<synchronous>, transform_indices = @transform_18, window_bounds = array<i64: 1, 1>}, {pipeline_mode = #tpu.pipeline_mode<synchronous>, transform_indices = @transform_19, window_bounds = array<i64: 1, 2560>}, {pipeline_mode = #tpu.pipeline_mode<synchronous>, transform_indices = @transform_20, window_bounds = array<i64: 1, 2560>}, {pipeline_mode = #tpu.pipeline_mode<synchronous>, transform_indices = @transform_21, window_bounds = array<i64: 1, 2560>}, {pipeline_mode = #tpu.pipeline_mode<synchronous>, transform_indices = @transform_22, window_bounds = array<i64: 1, 5>}, {pipeline_mode = #tpu.pipeline_mode<synchronous>, transform_indices = @transform_23, window_bounds = array<i64: 8, 6>}]} {
    %c0 = arith.constant 0 : index
    %c0_0 = arith.constant 0 : index
    %0 = vector.load %arg1[%c0, %c0_0] : memref<9x8xf32, #tpu.memory_space<vmem>>, vector<9x8xf32>
    %1 = vector.extract_strided_slice %0 {offsets = [0, 0], sizes = [9, 1], strides = [1, 1]} : vector<9x8xf32> to vector<9x1xf32>
    %2 = vector.extract_strided_slice %0 {offsets = [0, 1], sizes = [9, 1], strides = [1, 1]} : vector<9x8xf32> to vector<9x1xf32>
    %c0_1 = arith.constant 0 : index
    %c0_2 = arith.constant 0 : index
    %3 = vector.load %arg2[%c0_1, %c0_2] : memref<1x512xf32, #tpu.memory_space<vmem>>, vector<1x512xf32>
    %4 = vector.broadcast %2 : vector<9x1xf32> to vector<9x512xf32>
    %5 = vector.broadcast %3 : vector<1x512xf32> to vector<9x512xf32>
    %6 = arith.mulf %4, %5 : vector<9x512xf32>
    %c0_3 = arith.constant 0 : index
    %c0_4 = arith.constant 0 : index
    %7 = vector.load %arg3[%c0_3, %c0_4] : memref<1x512xf32, #tpu.memory_space<vmem>>, vector<1x512xf32>
    %8 = vector.broadcast %7 : vector<1x512xf32> to vector<9x512xf32>
    %9 = arith.addf %6, %8 : vector<9x512xf32>
    %cst = arith.constant 0.000000e+00 : f32
    %10 = vector.broadcast %cst : f32 to vector<9x512xf32>
    %11 = arith.maximumf %9, %10 : vector<9x512xf32>
    %c0_5 = arith.constant 0 : index
    %c0_6 = arith.constant 0 : index
    %12 = vector.load %arg4[%c0_5, %c0_6] : memref<512x256xf32, #tpu.memory_space<vmem>>, vector<512x256xf32>
    %cst_7 = arith.constant dense<0.000000e+00> : vector<9x256xf32>
    %13 = tpu.matmul %11, %12, %cst_7 {dimension_numbers = #tpu.dot_dimension_numbers<[1], [0], [0], [1], [0, 0, 1, 1], [], []>} : vector<9x512xf32>, vector<512x256xf32>, vector<9x256xf32> -> vector<9x256xf32>
    %c0_8 = arith.constant 0 : index
    %c0_9 = arith.constant 0 : index
    %14 = vector.load %arg5[%c0_8, %c0_9] : memref<1x256xf32, #tpu.memory_space<vmem>>, vector<1x256xf32>
    %15 = vector.broadcast %14 : vector<1x256xf32> to vector<9x256xf32>
    %16 = arith.addf %13, %15 : vector<9x256xf32>
    %cst_10 = arith.constant 0.000000e+00 : f32
    %17 = vector.broadcast %cst_10 : f32 to vector<9x256xf32>
    %18 = arith.maximumf %16, %17 : vector<9x256xf32>
    %c0_11 = arith.constant 0 : index
    %c0_12 = arith.constant 0 : index
    %19 = vector.load %arg6[%c0_11, %c0_12] : memref<1x256xf32, #tpu.memory_space<vmem>>, vector<1x256xf32>
    %20 = vector.broadcast %19 : vector<1x256xf32> to vector<9x256xf32>
    %21 = arith.mulf %18, %20 : vector<9x256xf32>
    %cst_13 = arith.constant dense<0.000000e+00> : vector<9xf32>
    %22 = vector.multi_reduction <add>, %21, %cst_13 [1] : vector<9x256xf32> to vector<9xf32>
    %23 = vector.shape_cast %22 : vector<9xf32> to vector<9x1xf32>
    %c0_14 = arith.constant 0 : index
    %c0_15 = arith.constant 0 : index
    %24 = vector.load %arg7[%c0_14, %c0_15] : memref<1x1xf32, #tpu.memory_space<vmem>>, vector<1x1xf32>
    %25 = vector.broadcast %24 : vector<1x1xf32> to vector<9x1xf32>
    %26 = arith.addf %23, %25 : vector<9x1xf32>
    %c0_16 = arith.constant 0 : index
    %c0_17 = arith.constant 0 : index
    %27 = vector.load %arg8[%c0_16, %c0_17] : memref<2x512xf32, #tpu.memory_space<vmem>>, vector<2x512xf32>
    %28 = vector.extract_strided_slice %27 {offsets = [0, 0], sizes = [1, 512], strides = [1, 1]} : vector<2x512xf32> to vector<1x512xf32>
    %29 = vector.broadcast %1 : vector<9x1xf32> to vector<9x512xf32>
    %30 = vector.broadcast %28 : vector<1x512xf32> to vector<9x512xf32>
    %31 = arith.mulf %29, %30 : vector<9x512xf32>
    %32 = vector.extract_strided_slice %27 {offsets = [1, 0], sizes = [1, 512], strides = [1, 1]} : vector<2x512xf32> to vector<1x512xf32>
    %33 = vector.broadcast %26 : vector<9x1xf32> to vector<9x512xf32>
    %34 = vector.broadcast %32 : vector<1x512xf32> to vector<9x512xf32>
    %35 = arith.mulf %33, %34 : vector<9x512xf32>
    %36 = arith.addf %31, %35 : vector<9x512xf32>
    %c0_18 = arith.constant 0 : index
    %c0_19 = arith.constant 0 : index
    %37 = vector.load %arg9[%c0_18, %c0_19] : memref<1x512xf32, #tpu.memory_space<vmem>>, vector<1x512xf32>
    %38 = vector.broadcast %37 : vector<1x512xf32> to vector<9x512xf32>
    %39 = arith.addf %36, %38 : vector<9x512xf32>
    %cst_20 = arith.constant 0.000000e+00 : f32
    %40 = vector.broadcast %cst_20 : f32 to vector<9x512xf32>
    %41 = arith.maximumf %39, %40 : vector<9x512xf32>
    %c0_21 = arith.constant 0 : index
    %c0_22 = arith.constant 0 : index
    %42 = vector.load %arg10[%c0_21, %c0_22] : memref<512x256xf32, #tpu.memory_space<vmem>>, vector<512x256xf32>
    %cst_23 = arith.constant dense<0.000000e+00> : vector<9x256xf32>
    %43 = tpu.matmul %41, %42, %cst_23 {dimension_numbers = #tpu.dot_dimension_numbers<[1], [0], [0], [1], [0, 0, 1, 1], [], []>} : vector<9x512xf32>, vector<512x256xf32>, vector<9x256xf32> -> vector<9x256xf32>
    %c0_24 = arith.constant 0 : index
    %c0_25 = arith.constant 0 : index
    %44 = vector.load %arg11[%c0_24, %c0_25] : memref<1x256xf32, #tpu.memory_space<vmem>>, vector<1x256xf32>
    %45 = vector.broadcast %44 : vector<1x256xf32> to vector<9x256xf32>
    %46 = arith.addf %43, %45 : vector<9x256xf32>
    %cst_26 = arith.constant 0.000000e+00 : f32
    %47 = vector.broadcast %cst_26 : f32 to vector<9x256xf32>
    %48 = arith.maximumf %46, %47 : vector<9x256xf32>
    %c0_27 = arith.constant 0 : index
    %c0_28 = arith.constant 0 : index
    %49 = vector.load %arg12[%c0_27, %c0_28] : memref<1x256xf32, #tpu.memory_space<vmem>>, vector<1x256xf32>
    %50 = vector.broadcast %49 : vector<1x256xf32> to vector<9x256xf32>
    %51 = arith.mulf %48, %50 : vector<9x256xf32>
    %cst_29 = arith.constant dense<0.000000e+00> : vector<9xf32>
    %52 = vector.multi_reduction <add>, %51, %cst_29 [1] : vector<9x256xf32> to vector<9xf32>
    %53 = vector.shape_cast %52 : vector<9xf32> to vector<9x1xf32>
    %c0_30 = arith.constant 0 : index
    %c0_31 = arith.constant 0 : index
    %54 = vector.load %arg13[%c0_30, %c0_31] : memref<1x1xf32, #tpu.memory_space<vmem>>, vector<1x1xf32>
    %55 = vector.broadcast %54 : vector<1x1xf32> to vector<9x1xf32>
    %56 = arith.addf %53, %55 : vector<9x1xf32>
    %c0_32 = arith.constant 0 : index
    %c0_33 = arith.constant 0 : index
    %57 = vector.load %arg14[%c0_32, %c0_33] : memref<1x512xf32, #tpu.memory_space<vmem>>, vector<1x512xf32>
    %58 = vector.broadcast %26 : vector<9x1xf32> to vector<9x512xf32>
    %59 = vector.broadcast %57 : vector<1x512xf32> to vector<9x512xf32>
    %60 = arith.mulf %58, %59 : vector<9x512xf32>
    %c0_34 = arith.constant 0 : index
    %c0_35 = arith.constant 0 : index
    %61 = vector.load %arg15[%c0_34, %c0_35] : memref<1x512xf32, #tpu.memory_space<vmem>>, vector<1x512xf32>
    %62 = vector.broadcast %61 : vector<1x512xf32> to vector<9x512xf32>
    %63 = arith.addf %60, %62 : vector<9x512xf32>
    %cst_36 = arith.constant 0.000000e+00 : f32
    %64 = vector.broadcast %cst_36 : f32 to vector<9x512xf32>
    %65 = arith.maximumf %63, %64 : vector<9x512xf32>
    %c0_37 = arith.constant 0 : index
    %c0_38 = arith.constant 0 : index
    %66 = vector.load %arg16[%c0_37, %c0_38] : memref<512x256xf32, #tpu.memory_space<vmem>>, vector<512x256xf32>
    %cst_39 = arith.constant dense<0.000000e+00> : vector<9x256xf32>
    %67 = tpu.matmul %65, %66, %cst_39 {dimension_numbers = #tpu.dot_dimension_numbers<[1], [0], [0], [1], [0, 0, 1, 1], [], []>} : vector<9x512xf32>, vector<512x256xf32>, vector<9x256xf32> -> vector<9x256xf32>
    %c0_40 = arith.constant 0 : index
    %c0_41 = arith.constant 0 : index
    %68 = vector.load %arg17[%c0_40, %c0_41] : memref<1x256xf32, #tpu.memory_space<vmem>>, vector<1x256xf32>
    %69 = vector.broadcast %68 : vector<1x256xf32> to vector<9x256xf32>
    %70 = arith.addf %67, %69 : vector<9x256xf32>
    %cst_42 = arith.constant 0.000000e+00 : f32
    %71 = vector.broadcast %cst_42 : f32 to vector<9x256xf32>
    %72 = arith.maximumf %70, %71 : vector<9x256xf32>
    %c0_43 = arith.constant 0 : index
    %c0_44 = arith.constant 0 : index
    %73 = vector.load %arg18[%c0_43, %c0_44] : memref<1x256xf32, #tpu.memory_space<vmem>>, vector<1x256xf32>
    %74 = vector.broadcast %73 : vector<1x256xf32> to vector<9x256xf32>
    %75 = arith.mulf %72, %74 : vector<9x256xf32>
    %cst_45 = arith.constant dense<0.000000e+00> : vector<9xf32>
    %76 = vector.multi_reduction <add>, %75, %cst_45 [1] : vector<9x256xf32> to vector<9xf32>
    %77 = vector.shape_cast %76 : vector<9xf32> to vector<9x1xf32>
    %c0_46 = arith.constant 0 : index
    %c0_47 = arith.constant 0 : index
    %78 = vector.load %arg19[%c0_46, %c0_47] : memref<1x1xf32, #tpu.memory_space<vmem>>, vector<1x1xf32>
    %79 = vector.broadcast %78 : vector<1x1xf32> to vector<9x1xf32>
    %80 = arith.addf %77, %79 : vector<9x1xf32>
    %81 = vector.extract_strided_slice %56 {offsets = [0, 0], sizes = [8, 1], strides = [1, 1]} : vector<9x1xf32> to vector<8x1xf32>
    %82 = vector.extract_strided_slice %80 {offsets = [0, 0], sizes = [8, 1], strides = [1, 1]} : vector<9x1xf32> to vector<8x1xf32>
    %83 = vector.extract_strided_slice %56 {offsets = [8, 0], sizes = [1, 1], strides = [1, 1]} : vector<9x1xf32> to vector<1x1xf32>
    %84 = vector.extract_strided_slice %0 {offsets = [0, 2], sizes = [8, 1], strides = [1, 1]} : vector<9x8xf32> to vector<8x1xf32>
    %cst_48 = arith.constant 0.000000e+00 : f32
    %85 = vector.broadcast %cst_48 : f32 to vector<8x1xf32>
    %86 = arith.subf %85, %84 : vector<8x1xf32>
    %87 = math.exp %86 : vector<8x1xf32>
    %cst_49 = arith.constant 1.000000e+00 : f32
    %88 = vector.broadcast %cst_49 : f32 to vector<8x1xf32>
    %89 = arith.addf %88, %87 : vector<8x1xf32>
    %90 = tpu.reciprocal %89 {approx = true} : vector<8x1xf32> -> vector<8x1xf32>
    %91 = vector.extract_strided_slice %0 {offsets = [0, 3], sizes = [8, 1], strides = [1, 1]} : vector<9x8xf32> to vector<8x1xf32>
    %cst_50 = arith.constant 0.000000e+00 : f32
    %92 = vector.broadcast %cst_50 : f32 to vector<8x1xf32>
    %93 = arith.subf %92, %91 : vector<8x1xf32>
    %94 = math.exp %93 : vector<8x1xf32>
    %cst_51 = arith.constant 1.000000e+00 : f32
    %95 = vector.broadcast %cst_51 : f32 to vector<8x1xf32>
    %96 = arith.addf %95, %94 : vector<8x1xf32>
    %97 = tpu.reciprocal %96 {approx = true} : vector<8x1xf32> -> vector<8x1xf32>
    %98 = vector.extract_strided_slice %0 {offsets = [0, 4], sizes = [8, 1], strides = [1, 1]} : vector<9x8xf32> to vector<8x1xf32>
    %cst_52 = arith.constant 0.000000e+00 : f32
    %99 = vector.broadcast %cst_52 : f32 to vector<8x1xf32>
    %100 = arith.maximumf %98, %99 : vector<8x1xf32>
    %101 = math.absf %98 : vector<8x1xf32>
    %cst_53 = arith.constant 0.000000e+00 : f32
    %102 = vector.broadcast %cst_53 : f32 to vector<8x1xf32>
    %103 = arith.subf %102, %101 : vector<8x1xf32>
    %104 = math.exp %103 : vector<8x1xf32>
    %cst_54 = arith.constant 1.000000e+00 : f32
    %105 = vector.broadcast %cst_54 : f32 to vector<8x1xf32>
    %106 = arith.addf %105, %104 : vector<8x1xf32>
    %107 = math.log %106 : vector<8x1xf32>
    %108 = arith.addf %100, %107 : vector<8x1xf32>
    %109 = vector.extract_strided_slice %0 {offsets = [0, 5], sizes = [8, 1], strides = [1, 1]} : vector<9x8xf32> to vector<8x1xf32>
    %cst_55 = arith.constant 0.000000e+00 : f32
    %110 = vector.broadcast %cst_55 : f32 to vector<8x1xf32>
    %111 = arith.subf %110, %109 : vector<8x1xf32>
    %112 = math.exp %111 : vector<8x1xf32>
    %cst_56 = arith.constant 1.000000e+00 : f32
    %113 = vector.broadcast %cst_56 : f32 to vector<8x1xf32>
    %114 = arith.addf %113, %112 : vector<8x1xf32>
    %115 = tpu.reciprocal %114 {approx = true} : vector<8x1xf32> -> vector<8x1xf32>
    %116 = vector.extract_strided_slice %0 {offsets = [0, 6], sizes = [8, 1], strides = [1, 1]} : vector<9x8xf32> to vector<8x1xf32>
    %cst_57 = arith.constant 0.000000e+00 : f32
    %117 = vector.broadcast %cst_57 : f32 to vector<8x1xf32>
    %118 = arith.subf %117, %116 : vector<8x1xf32>
    %119 = math.exp %118 : vector<8x1xf32>
    %cst_58 = arith.constant 1.000000e+00 : f32
    %120 = vector.broadcast %cst_58 : f32 to vector<8x1xf32>
    %121 = arith.addf %120, %119 : vector<8x1xf32>
    %122 = tpu.reciprocal %121 {approx = true} : vector<8x1xf32> -> vector<8x1xf32>
    %cst_59 = arith.constant 0.000000e+00 : f32
    %123 = vector.broadcast %cst_59 : f32 to vector<8x1xf32>
    %124 = arith.subf %123, %81 : vector<8x1xf32>
    %125 = math.exp %124 : vector<8x1xf32>
    %cst_60 = arith.constant 1.000000e+00 : f32
    %126 = vector.broadcast %cst_60 : f32 to vector<8x1xf32>
    %127 = arith.addf %126, %125 : vector<8x1xf32>
    %128 = tpu.reciprocal %127 {approx = true} : vector<8x1xf32> -> vector<8x1xf32>
    %cst_61 = arith.constant 0.000000e+00 : f32
    %129 = vector.broadcast %cst_61 : f32 to vector<8x1xf32>
    %130 = arith.subf %129, %82 : vector<8x1xf32>
    %131 = math.exp %130 : vector<8x1xf32>
    %cst_62 = arith.constant 1.000000e+00 : f32
    %132 = vector.broadcast %cst_62 : f32 to vector<8x1xf32>
    %133 = arith.addf %132, %131 : vector<8x1xf32>
    %134 = tpu.reciprocal %133 {approx = true} : vector<8x1xf32> -> vector<8x1xf32>
    %cst_63 = arith.constant 0.000000e+00 : f32
    %135 = vector.broadcast %cst_63 : f32 to vector<1x1xf32>
    %136 = arith.subf %135, %83 : vector<1x1xf32>
    %137 = math.exp %136 : vector<1x1xf32>
    %cst_64 = arith.constant 1.000000e+00 : f32
    %138 = vector.broadcast %cst_64 : f32 to vector<1x1xf32>
    %139 = arith.addf %138, %137 : vector<1x1xf32>
    %140 = tpu.reciprocal %139 {approx = true} : vector<1x1xf32> -> vector<1x1xf32>
    %cst_65 = arith.constant 1.000000e+00 : f32
    %141 = vector.broadcast %cst_65 : f32 to vector<8x1xf32>
    %142 = arith.subf %141, %90 : vector<8x1xf32>
    %143 = arith.mulf %142, %128 : vector<8x1xf32>
    %144 = arith.mulf %90, %134 : vector<8x1xf32>
    %145 = arith.addf %143, %144 : vector<8x1xf32>
    %cst_66 = arith.constant 0.000000e+00 : f32
    %146 = vector.broadcast %cst_66 : f32 to vector<8x1xf32>
    %147 = arith.subf %146, %145 : vector<8x1xf32>
    %148 = math.exp %147 : vector<8x1xf32>
    %cst_67 = arith.constant 1.000000e+00 : f32
    %149 = vector.broadcast %cst_67 : f32 to vector<8x1xf32>
    %150 = arith.addf %149, %148 : vector<8x1xf32>
    %151 = tpu.reciprocal %150 {approx = true} : vector<8x1xf32> -> vector<8x1xf32>
    %cst_68 = arith.constant 1.000000e+00 : f32
    %152 = vector.broadcast %cst_68 : f32 to vector<8x1xf32>
    %153 = arith.subf %152, %90 : vector<8x1xf32>
    %154 = vector.broadcast %140 : vector<1x1xf32> to vector<8x1xf32>
    %155 = arith.mulf %153, %154 : vector<8x1xf32>
    %156 = arith.mulf %90, %134 : vector<8x1xf32>
    %157 = arith.addf %155, %156 : vector<8x1xf32>
    %cst_69 = arith.constant 0.000000e+00 : f32
    %158 = vector.broadcast %cst_69 : f32 to vector<8x1xf32>
    %159 = arith.subf %158, %157 : vector<8x1xf32>
    %160 = math.exp %159 : vector<8x1xf32>
    %cst_70 = arith.constant 1.000000e+00 : f32
    %161 = vector.broadcast %cst_70 : f32 to vector<8x1xf32>
    %162 = arith.addf %161, %160 : vector<8x1xf32>
    %163 = tpu.reciprocal %162 {approx = true} : vector<8x1xf32> -> vector<8x1xf32>
    %164 = arith.mulf %97, %163 : vector<8x1xf32>
    %165 = arith.subf %151, %164 : vector<8x1xf32>
    %cst_71 = arith.constant 0.000000e+00 : f32
    %166 = vector.broadcast %cst_71 : f32 to vector<8x1xf32>
    %167 = arith.subf %166, %165 : vector<8x1xf32>
    %168 = math.exp %167 : vector<8x1xf32>
    %cst_72 = arith.constant 1.000000e+00 : f32
    %169 = vector.broadcast %cst_72 : f32 to vector<8x1xf32>
    %170 = arith.addf %169, %168 : vector<8x1xf32>
    %171 = tpu.reciprocal %170 {approx = true} : vector<8x1xf32> -> vector<8x1xf32>
    %cst_73 = arith.constant 1.000000e+00 : f32
    %172 = vector.broadcast %cst_73 : f32 to vector<8x1xf32>
    %173 = arith.subf %172, %122 : vector<8x1xf32>
    %cst_74 = arith.constant 1.702000e+00 : f32
    %174 = vector.broadcast %cst_74 : f32 to vector<8x1xf32>
    %175 = arith.mulf %174, %108 : vector<8x1xf32>
    %176 = arith.subf %171, %115 : vector<8x1xf32>
    %177 = arith.mulf %175, %176 : vector<8x1xf32>
    %cst_75 = arith.constant 0.000000e+00 : f32
    %178 = vector.broadcast %cst_75 : f32 to vector<8x1xf32>
    %179 = arith.subf %178, %177 : vector<8x1xf32>
    %180 = math.exp %179 : vector<8x1xf32>
    %cst_76 = arith.constant 1.000000e+00 : f32
    %181 = vector.broadcast %cst_76 : f32 to vector<8x1xf32>
    %182 = arith.addf %181, %180 : vector<8x1xf32>
    %183 = tpu.reciprocal %182 {approx = true} : vector<8x1xf32> -> vector<8x1xf32>
    %184 = arith.mulf %173, %183 : vector<8x1xf32>
    %185 = arith.addf %122, %184 : vector<8x1xf32>
    %c0_77 = arith.constant 0 : index
    %c0_78 = arith.constant 0 : index
    %186 = vector.load %arg24[%c0_77, %c0_78] : memref<8x6xf32, #tpu.memory_space<vmem>>, vector<8x1xf32>
    tpu.vector_store %arg24[%c0_77, %c0_78], %185 {strides = array<i32>} : memref<8x6xf32, #tpu.memory_space<vmem>>, vector<8x1xf32>,
    %c0_79 = arith.constant 0 : index
    %c0_80 = arith.constant 0 : index
    %187 = vector.load %arg20[%c0_79, %c0_80] : memref<1x2560xf32, #tpu.memory_space<vmem>>, vector<1x2560xf32>
    %188 = vector.broadcast %81 : vector<8x1xf32> to vector<8x2560xf32>
    %189 = vector.broadcast %187 : vector<1x2560xf32> to vector<8x2560xf32>
    %190 = arith.mulf %188, %189 : vector<8x2560xf32>
    %c0_81 = arith.constant 0 : index
    %c0_82 = arith.constant 0 : index
    %191 = vector.load %arg21[%c0_81, %c0_82] : memref<1x2560xf32, #tpu.memory_space<vmem>>, vector<1x2560xf32>
    %192 = vector.broadcast %191 : vector<1x2560xf32> to vector<8x2560xf32>
    %193 = arith.addf %190, %192 : vector<8x2560xf32>
    %cst_83 = arith.constant 0.000000e+00 : f32
    %194 = vector.broadcast %cst_83 : f32 to vector<8x2560xf32>
    %195 = arith.maximumf %193, %194 : vector<8x2560xf32>
    %c0_84 = arith.constant 0 : index
    %c0_85 = arith.constant 0 : index
    %196 = vector.load %arg22[%c0_84, %c0_85] : memref<1x2560xf32, #tpu.memory_space<vmem>>, vector<1x2560xf32>
    %197 = vector.broadcast %196 : vector<1x2560xf32> to vector<8x2560xf32>
    %198 = arith.mulf %195, %197 : vector<8x2560xf32>
    %c0_86 = arith.constant 0 : index
    %c0_87 = arith.constant 0 : index
    %199 = vector.load %arg23[%c0_86, %c0_87] : memref<1x5xf32, #tpu.memory_space<vmem>>, vector<1x5xf32>
    %200 = vector.extract_strided_slice %198 {offsets = [0, 0], sizes = [8, 512], strides = [1, 1]} : vector<8x2560xf32> to vector<8x512xf32>
    %cst_88 = arith.constant dense<0.000000e+00> : vector<8xf32>
    %201 = vector.multi_reduction <add>, %200, %cst_88 [1] : vector<8x512xf32> to vector<8xf32>
    %202 = vector.shape_cast %201 : vector<8xf32> to vector<8x1xf32>
    %203 = vector.extract_strided_slice %199 {offsets = [0, 0], sizes = [1, 1], strides = [1, 1]} : vector<1x5xf32> to vector<1x1xf32>
    %204 = vector.broadcast %203 : vector<1x1xf32> to vector<8x1xf32>
    %205 = arith.addf %202, %204 : vector<8x1xf32>
    %cst_89 = arith.constant 0.000000e+00 : f32
    %206 = vector.broadcast %cst_89 : f32 to vector<8x1xf32>
    %207 = arith.subf %206, %205 : vector<8x1xf32>
    %208 = math.exp %207 : vector<8x1xf32>
    %cst_90 = arith.constant 1.000000e+00 : f32
    %209 = vector.broadcast %cst_90 : f32 to vector<8x1xf32>
    %210 = arith.addf %209, %208 : vector<8x1xf32>
    %211 = tpu.reciprocal %210 {approx = true} : vector<8x1xf32> -> vector<8x1xf32>
    %c0_91 = arith.constant 0 : index
    %c1 = arith.constant 1 : index
    %212 = vector.load %arg24[%c0_91, %c1] : memref<8x6xf32, #tpu.memory_space<vmem>>, vector<8x1xf32>
    tpu.vector_store %arg24[%c0_91, %c1], %211 {strides = array<i32>} : memref<8x6xf32, #tpu.memory_space<vmem>>, vector<8x1xf32>,
    %213 = vector.extract_strided_slice %198 {offsets = [0, 512], sizes = [8, 512], strides = [1, 1]} : vector<8x2560xf32> to vector<8x512xf32>
    %cst_92 = arith.constant dense<0.000000e+00> : vector<8xf32>
    %214 = vector.multi_reduction <add>, %213, %cst_92 [1] : vector<8x512xf32> to vector<8xf32>
    %215 = vector.shape_cast %214 : vector<8xf32> to vector<8x1xf32>
    %216 = vector.extract_strided_slice %199 {offsets = [0, 1], sizes = [1, 1], strides = [1, 1]} : vector<1x5xf32> to vector<1x1xf32>
    %217 = vector.broadcast %216 : vector<1x1xf32> to vector<8x1xf32>
    %218 = arith.addf %215, %217 : vector<8x1xf32>
    %cst_93 = arith.constant 0.000000e+00 : f32
    %219 = vector.broadcast %cst_93 : f32 to vector<8x1xf32>
    %220 = arith.subf %219, %218 : vector<8x1xf32>
    %221 = math.exp %220 : vector<8x1xf32>
    %cst_94 = arith.constant 1.000000e+00 : f32
    %222 = vector.broadcast %cst_94 : f32 to vector<8x1xf32>
    %223 = arith.addf %222, %221 : vector<8x1xf32>
    %224 = tpu.reciprocal %223 {approx = true} : vector<8x1xf32> -> vector<8x1xf32>
    %c0_95 = arith.constant 0 : index
    %c2 = arith.constant 2 : index
    %225 = vector.load %arg24[%c0_95, %c2] : memref<8x6xf32, #tpu.memory_space<vmem>>, vector<8x1xf32>
    tpu.vector_store %arg24[%c0_95, %c2], %224 {strides = array<i32>} : memref<8x6xf32, #tpu.memory_space<vmem>>, vector<8x1xf32>,
    %226 = vector.extract_strided_slice %198 {offsets = [0, 1024], sizes = [8, 512], strides = [1, 1]} : vector<8x2560xf32> to vector<8x512xf32>
    %cst_96 = arith.constant dense<0.000000e+00> : vector<8xf32>
    %227 = vector.multi_reduction <add>, %226, %cst_96 [1] : vector<8x512xf32> to vector<8xf32>
    %228 = vector.shape_cast %227 : vector<8xf32> to vector<8x1xf32>
    %229 = vector.extract_strided_slice %199 {offsets = [0, 2], sizes = [1, 1], strides = [1, 1]} : vector<1x5xf32> to vector<1x1xf32>
    %230 = vector.broadcast %229 : vector<1x1xf32> to vector<8x1xf32>
    %231 = arith.addf %228, %230 : vector<8x1xf32>
    %cst_97 = arith.constant 0.000000e+00 : f32
    %232 = vector.broadcast %cst_97 : f32 to vector<8x1xf32>
    %233 = arith.subf %232, %231 : vector<8x1xf32>
    %234 = math.exp %233 : vector<8x1xf32>
    %cst_98 = arith.constant 1.000000e+00 : f32
    %235 = vector.broadcast %cst_98 : f32 to vector<8x1xf32>
    %236 = arith.addf %235, %234 : vector<8x1xf32>
    %237 = tpu.reciprocal %236 {approx = true} : vector<8x1xf32> -> vector<8x1xf32>
    %c0_99 = arith.constant 0 : index
    %c3 = arith.constant 3 : index
    %238 = vector.load %arg24[%c0_99, %c3] : memref<8x6xf32, #tpu.memory_space<vmem>>, vector<8x1xf32>
    tpu.vector_store %arg24[%c0_99, %c3], %237 {strides = array<i32>} : memref<8x6xf32, #tpu.memory_space<vmem>>, vector<8x1xf32>,
    %239 = vector.extract_strided_slice %198 {offsets = [0, 1536], sizes = [8, 512], strides = [1, 1]} : vector<8x2560xf32> to vector<8x512xf32>
    %cst_100 = arith.constant dense<0.000000e+00> : vector<8xf32>
    %240 = vector.multi_reduction <add>, %239, %cst_100 [1] : vector<8x512xf32> to vector<8xf32>
    %241 = vector.shape_cast %240 : vector<8xf32> to vector<8x1xf32>
    %242 = vector.extract_strided_slice %199 {offsets = [0, 3], sizes = [1, 1], strides = [1, 1]} : vector<1x5xf32> to vector<1x1xf32>
    %243 = vector.broadcast %242 : vector<1x1xf32> to vector<8x1xf32>
    %244 = arith.addf %241, %243 : vector<8x1xf32>
    %cst_101 = arith.constant 0.000000e+00 : f32
    %245 = vector.broadcast %cst_101 : f32 to vector<8x1xf32>
    %246 = arith.subf %245, %244 : vector<8x1xf32>
    %247 = math.exp %246 : vector<8x1xf32>
    %cst_102 = arith.constant 1.000000e+00 : f32
    %248 = vector.broadcast %cst_102 : f32 to vector<8x1xf32>
    %249 = arith.addf %248, %247 : vector<8x1xf32>
    %250 = tpu.reciprocal %249 {approx = true} : vector<8x1xf32> -> vector<8x1xf32>
    %c0_103 = arith.constant 0 : index
    %c4 = arith.constant 4 : index
    %251 = vector.load %arg24[%c0_103, %c4] : memref<8x6xf32, #tpu.memory_space<vmem>>, vector<8x1xf32>
    tpu.vector_store %arg24[%c0_103, %c4], %250 {strides = array<i32>} : memref<8x6xf32, #tpu.memory_space<vmem>>, vector<8x1xf32>,
    %252 = vector.extract_strided_slice %198 {offsets = [0, 2048], sizes = [8, 512], strides = [1, 1]} : vector<8x2560xf32> to vector<8x512xf32>
    %cst_104 = arith.constant dense<0.000000e+00> : vector<8xf32>
    %253 = vector.multi_reduction <add>, %252, %cst_104 [1] : vector<8x512xf32> to vector<8xf32>
    %254 = vector.shape_cast %253 : vector<8xf32> to vector<8x1xf32>
    %255 = vector.extract_strided_slice %199 {offsets = [0, 4], sizes = [1, 1], strides = [1, 1]} : vector<1x5xf32> to vector<1x1xf32>
    %256 = vector.broadcast %255 : vector<1x1xf32> to vector<8x1xf32>
    %257 = arith.addf %254, %256 : vector<8x1xf32>
    %cst_105 = arith.constant 0.000000e+00 : f32
    %258 = vector.broadcast %cst_105 : f32 to vector<8x1xf32>
    %259 = arith.subf %258, %257 : vector<8x1xf32>
    %260 = math.exp %259 : vector<8x1xf32>
    %cst_106 = arith.constant 1.000000e+00 : f32
    %261 = vector.broadcast %cst_106 : f32 to vector<8x1xf32>
    %262 = arith.addf %261, %260 : vector<8x1xf32>
    %263 = tpu.reciprocal %262 {approx = true} : vector<8x1xf32> -> vector<8x1xf32>
    %c0_107 = arith.constant 0 : index
    %c5 = arith.constant 5 : index
    %264 = vector.load %arg24[%c0_107, %c5] : memref<8x6xf32, #tpu.memory_space<vmem>>, vector<8x1xf32>
    tpu.vector_store %arg24[%c0_107, %c5], %263 {strides = array<i32>} : memref<8x6xf32, #tpu.memory_space<vmem>>, vector<8x1xf32>,
    return
  }
  func.func @transform_0(%arg0: i32) -> (i32, i32) {
    %c0_i32 = arith.constant 0 : i32
    %c0_i32_0 = arith.constant 0 : i32
    %c0_i32_1 = arith.constant 0 : i32
    return %c0_i32, %c0_i32_0 : i32, i32
  }
  func.func @transform_1(%arg0: i32) -> (i32, i32) {
    %c0_i32 = arith.constant 0 : i32
    %c0_i32_0 = arith.constant 0 : i32
    %c0_i32_1 = arith.constant 0 : i32
    return %c0_i32, %c0_i32_0 : i32, i32
  }
  func.func @transform_2(%arg0: i32) -> (i32, i32) {
    %c0_i32 = arith.constant 0 : i32
    %c0_i32_0 = arith.constant 0 : i32
    %c0_i32_1 = arith.constant 0 : i32
    return %c0_i32, %c0_i32_0 : i32, i32
  }
  func.func @transform_3(%arg0: i32) -> (i32, i32) {
    %c0_i32 = arith.constant 0 : i32
    %c0_i32_0 = arith.constant 0 : i32
    %c0_i32_1 = arith.constant 0 : i32
    return %c0_i32, %c0_i32_0 : i32, i32
  }
  func.func @transform_4(%arg0: i32) -> (i32, i32) {
    %c0_i32 = arith.constant 0 : i32
    %c0_i32_0 = arith.constant 0 : i32
    %c0_i32_1 = arith.constant 0 : i32
    return %c0_i32, %c0_i32_0 : i32, i32
  }
  func.func @transform_5(%arg0: i32) -> (i32, i32) {
    %c0_i32 = arith.constant 0 : i32
    %c0_i32_0 = arith.constant 0 : i32
    %c0_i32_1 = arith.constant 0 : i32
    return %c0_i32, %c0_i32_0 : i32, i32
  }
  func.func @transform_6(%arg0: i32) -> (i32, i32) {
    %c0_i32 = arith.constant 0 : i32
    %c0_i32_0 = arith.constant 0 : i32
    %c0_i32_1 = arith.constant 0 : i32
    return %c0_i32, %c0_i32_0 : i32, i32
  }
  func.func @transform_7(%arg0: i32) -> (i32, i32) {
    %c0_i32 = arith.constant 0 : i32
    %c0_i32_0 = arith.constant 0 : i32
    %c0_i32_1 = arith.constant 0 : i32
    return %c0_i32, %c0_i32_0 : i32, i32
  }
  func.func @transform_8(%arg0: i32) -> (i32, i32) {
    %c0_i32 = arith.constant 0 : i32
    %c0_i32_0 = arith.constant 0 : i32
    %c0_i32_1 = arith.constant 0 : i32
    return %c0_i32, %c0_i32_0 : i32, i32
  }
  func.func @transform_9(%arg0: i32) -> (i32, i32) {
    %c0_i32 = arith.constant 0 : i32
    %c0_i32_0 = arith.constant 0 : i32
    %c0_i32_1 = arith.constant 0 : i32
    return %c0_i32, %c0_i32_0 : i32, i32
  }
  func.func @transform_10(%arg0: i32) -> (i32, i32) {
    %c0_i32 = arith.constant 0 : i32
    %c0_i32_0 = arith.constant 0 : i32
    %c0_i32_1 = arith.constant 0 : i32
    return %c0_i32, %c0_i32_0 : i32, i32
  }
  func.func @transform_11(%arg0: i32) -> (i32, i32) {
    %c0_i32 = arith.constant 0 : i32
    %c0_i32_0 = arith.constant 0 : i32
    %c0_i32_1 = arith.constant 0 : i32
    return %c0_i32, %c0_i32_0 : i32, i32
  }
  func.func @transform_12(%arg0: i32) -> (i32, i32) {
    %c0_i32 = arith.constant 0 : i32
    %c0_i32_0 = arith.constant 0 : i32
    %c0_i32_1 = arith.constant 0 : i32
    return %c0_i32, %c0_i32_0 : i32, i32
  }
  func.func @transform_13(%arg0: i32) -> (i32, i32) {
    %c0_i32 = arith.constant 0 : i32
    %c0_i32_0 = arith.constant 0 : i32
    %c0_i32_1 = arith.constant 0 : i32
    return %c0_i32, %c0_i32_0 : i32, i32
  }
  func.func @transform_14(%arg0: i32) -> (i32, i32) {
    %c0_i32 = arith.constant 0 : i32
    %c0_i32_0 = arith.constant 0 : i32
    %c0_i32_1 = arith.constant 0 : i32
    return %c0_i32, %c0_i32_0 : i32, i32
  }
  func.func @transform_15(%arg0: i32) -> (i32, i32) {
    %c0_i32 = arith.constant 0 : i32
    %c0_i32_0 = arith.constant 0 : i32
    %c0_i32_1 = arith.constant 0 : i32
    return %c0_i32, %c0_i32_0 : i32, i32
  }
  func.func @transform_16(%arg0: i32) -> (i32, i32) {
    %c0_i32 = arith.constant 0 : i32
    %c0_i32_0 = arith.constant 0 : i32
    %c0_i32_1 = arith.constant 0 : i32
    return %c0_i32, %c0_i32_0 : i32, i32
  }
  func.func @transform_17(%arg0: i32) -> (i32, i32) {
    %c0_i32 = arith.constant 0 : i32
    %c0_i32_0 = arith.constant 0 : i32
    %c0_i32_1 = arith.constant 0 : i32
    return %c0_i32, %c0_i32_0 : i32, i32
  }
  func.func @transform_18(%arg0: i32) -> (i32, i32) {
    %c0_i32 = arith.constant 0 : i32
    %c0_i32_0 = arith.constant 0 : i32
    %c0_i32_1 = arith.constant 0 : i32
    return %c0_i32, %c0_i32_0 : i32, i32
  }
  func.func @transform_19(%arg0: i32) -> (i32, i32) {
    %c0_i32 = arith.constant 0 : i32
    %c0_i32_0 = arith.constant 0 : i32
    %c0_i32_1 = arith.constant 0 : i32
    return %c0_i32, %c0_i32_0 : i32, i32
  }
  func.func @transform_20(%arg0: i32) -> (i32, i32) {
    %c0_i32 = arith.constant 0 : i32
    %c0_i32_0 = arith.constant 0 : i32
    %c0_i32_1 = arith.constant 0 : i32
    return %c0_i32, %c0_i32_0 : i32, i32
  }
  func.func @transform_21(%arg0: i32) -> (i32, i32) {
    %c0_i32 = arith.constant 0 : i32
    %c0_i32_0 = arith.constant 0 : i32
    %c0_i32_1 = arith.constant 0 : i32
    return %c0_i32, %c0_i32_0 : i32, i32
  }
  func.func @transform_22(%arg0: i32) -> (i32, i32) {
    %c0_i32 = arith.constant 0 : i32
    %c0_i32_0 = arith.constant 0 : i32
    %c0_i32_1 = arith.constant 0 : i32
    return %c0_i32, %c0_i32_0 : i32, i32
  }
  func.func @transform_23(%arg0: i32) -> (i32, i32) {
    %c0_i32 = arith.constant 0 : i32
    %c0_i32_0 = arith.constant 0 : i32
    %c0_i32_1 = arith.constant 0 : i32
    return %c0_i32, %c0_i32_0 : i32, i32
  }
}

</mosaic_0001>

<llo_original>
// kernel: irtnet_forward.1
$region0: #{irtnet_forward.1}
  #allocation0 [shape = 'u32[]', space=smem, size = 0x4, offset = 0x4, fixed_abs, tag = 'smem constant byte address 0x4 - core index']
  #allocation1 [shape = 'u32[144,128]{1,0:T(1,128)}', space=vmem, size = 0x12000, scoped, tag = 'internal scratch']
  #allocation2 [shape = 'f32[1,1]{1,0:T(1,128)S(1)}', space=vmem, size = 0x200, scoped, tag = 'scoped memory for irtnet_forward.1']
  #allocation3 [shape = 'f32[1,1]{1,0:T(1,128)S(1)}', space=vmem, size = 0x200, scoped, tag = 'scoped memory for irtnet_forward.1']
  #allocation4 [shape = 'f32[1,1]{1,0:T(1,128)S(1)}', space=vmem, size = 0x200, scoped, tag = 'scoped memory for irtnet_forward.1']
  %s0 = inlined_call_operand.vmem [shape: f32[9,8], index: 0, kind: input, shape index: {}]
  %s1 = inlined_call_operand.vmem [shape: f32[1,512], index: 1, kind: input, shape index: {}]
  %s2 = inlined_call_operand.vmem [shape: f32[1,512], index: 2, kind: input, shape index: {}]
  %s3 = inlined_call_operand.vmem [shape: f32[512,256], index: 3, kind: input, shape index: {}]
  %s4 = inlined_call_operand.vmem [shape: f32[1,256], index: 4, kind: input, shape index: {}]
  %s5 = inlined_call_operand.vmem [shape: f32[1,256], index: 5, kind: input, shape index: {}]
  %s6 = inlined_call_operand.<no memory space> [shape: f32[1,1], index: 6, kind: input, shape index: {}]
  %s7 = inlined_call_operand.vmem [shape: f32[2,512], index: 7, kind: input, shape index: {}]
  %s8 = inlined_call_operand.vmem [shape: f32[1,512], index: 8, kind: input, shape index: {}]
  %s9 = inlined_call_operand.vmem [shape: f32[512,256], index: 9, kind: input, shape index: {}]
  %s10 = inlined_call_operand.vmem [shape: f32[1,256], index: 10, kind: input, shape index: {}]
  %s11 = inlined_call_operand.vmem [shape: f32[1,256], index: 11, kind: input, shape index: {}]
  %s12 = inlined_call_operand.<no memory space> [shape: f32[1,1], index: 12, kind: input, shape index: {}]
  %s13 = inlined_call_operand.vmem [shape: f32[1,512], index: 13, kind: input, shape index: {}]
  %s14 = inlined_call_operand.vmem [shape: f32[1,512], index: 14, kind: input, shape index: {}]
  %s15 = inlined_call_operand.vmem [shape: f32[512,256], index: 15, kind: input, shape index: {}]
  %s16 = inlined_call_operand.vmem [shape: f32[1,256], index: 16, kind: input, shape index: {}]
  %s17 = inlined_call_operand.vmem [shape: f32[1,256], index: 17, kind: input, shape index: {}]
  %s18 = inlined_call_operand.<no memory space> [shape: f32[1,1], index: 18, kind: input, shape index: {}]
  %s19 = inlined_call_operand.vmem [shape: f32[1,2560], index: 19, kind: input, shape index: {}]
  %s20 = inlined_call_operand.vmem [shape: f32[1,2560], index: 20, kind: input, shape index: {}]
  %s21 = inlined_call_operand.vmem [shape: f32[1,2560], index: 21, kind: input, shape index: {}]
  %s22 = inlined_call_operand.vmem [shape: f32[1,5], index: 22, kind: input, shape index: {}]
  %s23 = inlined_call_operand.vmem [shape: f32[8,6], index: 23, kind: output, shape index: {}]
  %s24 = sld [smem:[#allocation0]]
  $region102: #{irtnet_forward.1} parent=0
    _
  %s26 = ssub.s32 1, %s24
  %s27 = scalar_select 0, %s26, %s24
  %v28 = vstv %s6
  %29 = vst [vmem:[#allocation2] sm:$0x1] %v28
  %v30 = vstv %s12
  %31 = vst [vmem:[#allocation3] sm:$0x1] %v30
  %v32 = vstv %s18
  %33 = vst [vmem:[#allocation4] sm:$0x1] %v32
  // Predicated region
  $region2: #{irtnet_forward.1} parent=0 // pred_check
    _
  $region3: #{irtnet_forward.1} parent=0 // pred_check_branch
    %35 = sbr.rel (0) target = $region5
  $region4: #{irtnet_forward.1} parent=0 // pred_region
    _
  $region5: #{irtnet_forward.1} parent=0 // pred_fallthru
    _
  // Predicated region
  $region6: #{irtnet_forward.1} parent=0 // pred_check
    _
  $region7: #{irtnet_forward.1} parent=0 // pred_check_branch
    %37 = sbr.rel (0) target = $region9
  $region8: #{irtnet_forward.1} parent=0 // pred_region
    _
  $region9: #{irtnet_forward.1} parent=0 // pred_fallthru
    _
  // Predicated region
  $region10: #{irtnet_forward.1} parent=0 // pred_check
    _
  $region11: #{irtnet_forward.1} parent=0 // pred_check_branch
    %39 = sbr.rel (0) target = $region13
  $region12: #{irtnet_forward.1} parent=0 // pred_region
    _
  $region13: #{irtnet_forward.1} parent=0 // pred_fallthru
    _
  // Predicated region
  $region14: #{irtnet_forward.1} parent=0 // pred_check
    _
  $region15: #{irtnet_forward.1} parent=0 // pred_check_branch
    %41 = sbr.rel (0) target = $region17
  $region16: #{irtnet_forward.1} parent=0 // pred_region
    _
  $region17: #{irtnet_forward.1} parent=0 // pred_fallthru
    _
  // Predicated region
  $region18: #{irtnet_forward.1} parent=0 // pred_check
    _
  $region19: #{irtnet_forward.1} parent=0 // pred_check_branch
    %43 = sbr.rel (0) target = $region21
  $region20: #{irtnet_forward.1} parent=0 // pred_region
    _
  $region21: #{irtnet_forward.1} parent=0 // pred_fallthru
    _
  // Predicated region
  $region22: #{irtnet_forward.1} parent=0 // pred_check
    _
  $region23: #{irtnet_forward.1} parent=0 // pred_check_branch
    %45 = sbr.rel (0) target = $region25
  $region24: #{irtnet_forward.1} parent=0 // pred_region
    _
  $region25: #{irtnet_forward.1} parent=0 // pred_fallthru
    _
  // Predicated region
  $region26: #{irtnet_forward.1} parent=0 // pred_check
    _
  $region27: #{irtnet_forward.1} parent=0 // pred_check_branch
    %47 = sbr.rel (0) target = $region29
  $region28: #{irtnet_forward.1} parent=0 // pred_region
    _
  $region29: #{irtnet_forward.1} parent=0 // pred_fallthru
    _
  // Predicated region
  $region30: #{irtnet_forward.1} parent=0 // pred_check
    _
  $region31: #{irtnet_forward.1} parent=0 // pred_check_branch
    %49 = sbr.rel (0) target = $region33
  $region32: #{irtnet_forward.1} parent=0 // pred_region
    _
  $region33: #{irtnet_forward.1} parent=0 // pred_fallthru
    _
  // Predicated region
  $region34: #{irtnet_forward.1} parent=0 // pred_check
    _
  $region35: #{irtnet_forward.1} parent=0 // pred_check_branch
    %51 = sbr.rel (0) target = $region37
  $region36: #{irtnet_forward.1} parent=0 // pred_region
    _
  $region37: #{irtnet_forward.1} parent=0 // pred_fallthru
    _
  // Predicated region
  $region38: #{irtnet_forward.1} parent=0 // pred_check
    _
  $region39: #{irtnet_forward.1} parent=0 // pred_check_branch
    %53 = sbr.rel (0) target = $region41
  $region40: #{irtnet_forward.1} parent=0 // pred_region
    _
  $region41: #{irtnet_forward.1} parent=0 // pred_fallthru
    _
  // Predicated region
  $region42: #{irtnet_forward.1} parent=0 // pred_check
    _
  $region43: #{irtnet_forward.1} parent=0 // pred_check_branch
    %55 = sbr.rel (0) target = $region45
  $region44: #{irtnet_forward.1} parent=0 // pred_region
    _
  $region45: #{irtnet_forward.1} parent=0 // pred_fallthru
    _
  // Predicated region
  $region46: #{irtnet_forward.1} parent=0 // pred_check
    _
  $region47: #{irtnet_forward.1} parent=0 // pred_check_branch
    %57 = sbr.rel (0) target = $region49
  $region48: #{irtnet_forward.1} parent=0 // pred_region
    _
  $region49: #{irtnet_forward.1} parent=0 // pred_fallthru
    _
  // Predicated region
  $region50: #{irtnet_forward.1} parent=0 // pred_check
    _
  $region51: #{irtnet_forward.1} parent=0 // pred_check_branch
    %59 = sbr.rel (0) target = $region53
  $region52: #{irtnet_forward.1} parent=0 // pred_region
    _
  $region53: #{irtnet_forward.1} parent=0 // pred_fallthru
    _
  // Predicated region
  $region54: #{irtnet_forward.1} parent=0 // pred_check
    _
  $region55: #{irtnet_forward.1} parent=0 // pred_check_branch
    %61 = sbr.rel (0) target = $region57
  $region56: #{irtnet_forward.1} parent=0 // pred_region
    _
  $region57: #{irtnet_forward.1} parent=0 // pred_fallthru
    _
  // Predicated region
  $region58: #{irtnet_forward.1} parent=0 // pred_check
    _
  $region59: #{irtnet_forward.1} parent=0 // pred_check_branch
    %63 = sbr.rel (0) target = $region61
  $region60: #{irtnet_forward.1} parent=0 // pred_region
    _
  $region61: #{irtnet_forward.1} parent=0 // pred_fallthru
    _
  // Predicated region
  $region62: #{irtnet_forward.1} parent=0 // pred_check
    _
  $region63: #{irtnet_forward.1} parent=0 // pred_check_branch
    %65 = sbr.rel (0) target = $region65
  $region64: #{irtnet_forward.1} parent=0 // pred_region
    _
  $region65: #{irtnet_forward.1} parent=0 // pred_fallthru
    _
  // Predicated region
  $region66: #{irtnet_forward.1} parent=0 // pred_check
    _
  $region67: #{irtnet_forward.1} parent=0 // pred_check_branch
    %67 = sbr.rel (0) target = $region69
  $region68: #{irtnet_forward.1} parent=0 // pred_region
    _
  $region69: #{irtnet_forward.1} parent=0 // pred_fallthru
    _
  // Predicated region
  $region70: #{irtnet_forward.1} parent=0 // pred_check
    _
  $region71: #{irtnet_forward.1} parent=0 // pred_check_branch
    %69 = sbr.rel (0) target = $region73
  $region72: #{irtnet_forward.1} parent=0 // pred_region
    _
  $region73: #{irtnet_forward.1} parent=0 // pred_fallthru
    _
  // Predicated region
  $region74: #{irtnet_forward.1} parent=0 // pred_check
    _
  $region75: #{irtnet_forward.1} parent=0 // pred_check_branch
    %71 = sbr.rel (0) target = $region77
  $region76: #{irtnet_forward.1} parent=0 // pred_region
    _
  $region77: #{irtnet_forward.1} parent=0 // pred_fallthru
    _
  // Predicated region
  $region78: #{irtnet_forward.1} parent=0 // pred_check
    _
  $region79: #{irtnet_forward.1} parent=0 // pred_check_branch
    %73 = sbr.rel (0) target = $region81
  $region80: #{irtnet_forward.1} parent=0 // pred_region
    _
  $region81: #{irtnet_forward.1} parent=0 // pred_fallthru
    _
  // Predicated region
  $region82: #{irtnet_forward.1} parent=0 // pred_check
    _
  $region83: #{irtnet_forward.1} parent=0 // pred_check_branch
    %75 = sbr.rel (0) target = $region85
  $region84: #{irtnet_forward.1} parent=0 // pred_region
    _
  $region85: #{irtnet_forward.1} parent=0 // pred_fallthru
    _
  // Predicated region
  $region86: #{irtnet_forward.1} parent=0 // pred_check
    _
  $region87: #{irtnet_forward.1} parent=0 // pred_check_branch
    %77 = sbr.rel (0) target = $region89
  $region88: #{irtnet_forward.1} parent=0 // pred_region
    _
  $region89: #{irtnet_forward.1} parent=0 // pred_fallthru
    _
  // Predicated region
  $region90: #{irtnet_forward.1} parent=0 // pred_check
    _
  $region91: #{irtnet_forward.1} parent=0 // pred_check_branch
    %79 = sbr.rel (0) target = $region93
  $region92: #{irtnet_forward.1} parent=0 // pred_region
    _
  $region93: #{irtnet_forward.1} parent=0 // pred_fallthru
    _
  %v80 = vld [vmem:[%s0] sm:$0xff]
  %v81 = vld [vmem:[%s0 + $0x8] sm:$0x1]
  %v82 = vld [vmem:[%s1] sm:$0xf]
  %84 = vset.pattern.permute.xlu0 1
  %85 = vperm.xlu0 %84, %v80
  %v86 = vpop.permute.xlu0 %85
  %89 = vset.pattern.permute.xlu0 1
  %90 = vperm.xlu0 %89, %v81
  %v91 = vpop.permute.xlu0 %90
  %v94 = vlaneseq
  %v95 = vshrl.u32 %v94, 7
  %v96 = vsub.s32 0, %v95
  %v97 = vrot.slane %v82, %v96
  %v98 = vlaneseq
  %v99 = vshrl.u32 %v98, 7
  %v100 = vsub.s32 1, %v99
  %v101 = vrot.slane %v82, %v100
  %v102 = vlaneseq
  %v103 = vshrl.u32 %v102, 7
  %v104 = vsub.s32 2, %v103
  %v105 = vrot.slane %v82, %v104
  %v106 = vlaneseq
  %v107 = vshrl.u32 %v106, 7
  %v108 = vsub.s32 3, %v107
  %v109 = vrot.slane %v82, %v108
  %v114 = vmul.f32 %v86, %v97
  %v115 = vmul.f32 %v86, %v101
  %v116 = vmul.f32 %v86, %v105
  %v117 = vmul.f32 %v86, %v109
  %v118 = vmul.f32 %v91, %v97
  %v119 = vmul.f32 %v91, %v101
  %v120 = vmul.f32 %v91, %v105
  %v121 = vmul.f32 %v91, %v109
  %v122 = vld [vmem:[%s2] sm:$0xf]
  %v124 = vlaneseq
  %v125 = vshrl.u32 %v124, 7
  %v126 = vsub.s32 0, %v125
  %v127 = vrot.slane %v122, %v126
  %v128 = vlaneseq
  %v129 = vshrl.u32 %v128, 7
  %v130 = vsub.s32 1, %v129
  %v131 = vrot.slane %v122, %v130
  %v132 = vlaneseq
  %v133 = vshrl.u32 %v132, 7
  %v134 = vsub.s32 2, %v133
  %v135 = vrot.slane %v122, %v134
  %v136 = vlaneseq
  %v137 = vshrl.u32 %v136, 7
  %v138 = vsub.s32 3, %v137
  %v139 = vrot.slane %v122, %v138
  %v144 = vadd.f32 %v114, %v127
  %v145 = vadd.f32 %v115, %v131
  %v146 = vadd.f32 %v116, %v135
  %v147 = vadd.f32 %v117, %v139
  %v148 = vadd.f32 %v118, %v127
  %v149 = vadd.f32 %v119, %v131
  %v150 = vadd.f32 %v120, %v135
  %v151 = vadd.f32 %v121, %v139
  %v152 = vmax.f32 %v144, 0.0
  %v153 = vmax.f32 %v145, 0.0
  %v154 = vmax.f32 %v146, 0.0
  %v155 = vmax.f32 %v147, 0.0
  %v156 = vmax.f32 %v148, 0.0
  %v157 = vmax.f32 %v149, 0.0
  %v158 = vmax.f32 %v150, 0.0
  %v159 = vmax.f32 %v151, 0.0
  %v160 = vld [vmem:[%s3] sm:$0xff]
  %v161 = vld [vmem:[%s3 + $0x8] sm:$0xff]
  %v162 = vld [vmem:[%s3 + $0x10] sm:$0xff]
  %v163 = vld [vmem:[%s3 + $0x18] sm:$0xff]
  %v164 = vld [vmem:[%s3 + $0x20] sm:$0xff]
  %v165 = vld [vmem:[%s3 + $0x28] sm:$0xff]
  %v166 = vld [vmem:[%s3 + $0x30] sm:$0xff]
  %v167 = vld [vmem:[%s3 + $0x38] sm:$0xff]
  %v168 = vld [vmem:[%s3 + $0x40] sm:$0xff]
  %v169 = vld [vmem:[%s3 + $0x48] sm:$0xff]
  %v170 = vld [vmem:[%s3 + $0x50] sm:$0xff]
  %v171 = vld [vmem:[%s3 + $0x58] sm:$0xff]
  %v172 = vld [vmem:[%s3 + $0x60] sm:$0xff]
  %v173 = vld [vmem:[%s3 + $0x68] sm:$0xff]
  %v174 = vld [vmem:[%s3 + $0x70] sm:$0xff]
  %v175 = vld [vmem:[%s3 + $0x78] sm:$0xff]
  %v176 = vld [vmem:[%s3 + $0x80] sm:$0xff]
  %v177 = vld [vmem:[%s3 + $0x88] sm:$0xff]
  %v178 = vld [vmem:[%s3 + $0x90] sm:$0xff]
  %v179 = vld [vmem:[%s3 + $0x98] sm:$0xff]
  %v180 = vld [vmem:[%s3 + $0xa0] sm:$0xff]
  %v181 = vld [vmem:[%s3 + $0xa8] sm:$0xff]
  %v182 = vld [vmem:[%s3 + $0xb0] sm:$0xff]
  %v183 = vld [vmem:[%s3 + $0xb8] sm:$0xff]
  %v184 = vld [vmem:[%s3 + $0xc0] sm:$0xff]
  %v185 = vld [vmem:[%s3 + $0xc8] sm:$0xff]
  %v186 = vld [vmem:[%s3 + $0xd0] sm:$0xff]
  %v187 = vld [vmem:[%s3 + $0xd8] sm:$0xff]
  %v188 = vld [vmem:[%s3 + $0xe0] sm:$0xff]
  %v189 = vld [vmem:[%s3 + $0xe8] sm:$0xff]
  %v190 = vld [vmem:[%s3 + $0xf0] sm:$0xff]
  %v191 = vld [vmem:[%s3 + $0xf8] sm:$0xff]
  %v192 = vld [vmem:[%s3 + $0x100] sm:$0xff]
  %v193 = vld [vmem:[%s3 + $0x108] sm:$0xff]
  %v194 = vld [vmem:[%s3 + $0x110] sm:$0xff]
  %v195 = vld [vmem:[%s3 + $0x118] sm:$0xff]
  %v196 = vld [vmem:[%s3 + $0x120] sm:$0xff]
  %v197 = vld [vmem:[%s3 + $0x128] sm:$0xff]
  %v198 = vld [vmem:[%s3 + $0x130] sm:$0xff]
  %v199 = vld [vmem:[%s3 + $0x138] sm:$0xff]
  %v200 = vld [vmem:[%s3 + $0x140] sm:$0xff]
  %v201 = vld [vmem:[%s3 + $0x148] sm:$0xff]
  %v202 = vld [vmem:[%s3 + $0x150] sm:$0xff]
  %v203 = vld [vmem:[%s3 + $0x158] sm:$0xff]
  %v204 = vld [vmem:[%s3 + $0x160] sm:$0xff]
  %v205 = vld [vmem:[%s3 + $0x168] sm:$0xff]
  %v206 = vld [vmem:[%s3 + $0x170] sm:$0xff]
  %v207 = vld [vmem:[%s3 + $0x178] sm:$0xff]
  %v208 = vld [vmem:[%s3 + $0x180] sm:$0xff]
  %v209 = vld [vmem:[%s3 + $0x188] sm:$0xff]
  %v210 = vld [vmem:[%s3 + $0x190] sm:$0xff]
  %v211 = vld [vmem:[%s3 + $0x198] sm:$0xff]
  %v212 = vld [vmem:[%s3 + $0x1a0] sm:$0xff]
  %v213 = vld [vmem:[%s3 + $0x1a8] sm:$0xff]
  %v214 = vld [vmem:[%s3 + $0x1b0] sm:$0xff]
  %v215 = vld [vmem:[%s3 + $0x1b8] sm:$0xff]
  %v216 = vld [vmem:[%s3 + $0x1c0] sm:$0xff]
  %v217 = vld [vmem:[%s3 + $0x1c8] sm:$0xff]
  %v218 = vld [vmem:[%s3 + $0x1d0] sm:$0xff]
  %v219 = vld [vmem:[%s3 + $0x1d8] sm:$0xff]
  %v220 = vld [vmem:[%s3 + $0x1e0] sm:$0xff]
  %v221 = vld [vmem:[%s3 + $0x1e8] sm:$0xff]
  %v222 = vld [vmem:[%s3 + $0x1f0] sm:$0xff]
  %v223 = vld [vmem:[%s3 + $0x1f8] sm:$0xff]
  %v224 = vld [vmem:[%s3 + $0x200] sm:$0xff]
  %v225 = vld [vmem:[%s3 + $0x208] sm:$0xff]
  %v226 = vld [vmem:[%s3 + $0x210] sm:$0xff]
  %v227 = vld [vmem:[%s3 + $0x218] sm:$0xff]
  %v228 = vld [vmem:[%s3 + $0x220] sm:$0xff]
  %v229 = vld [vmem:[%s3 + $0x228] sm:$0xff]
  %v230 = vld [vmem:[%s3 + $0x230] sm:$0xff]
  %v231 = vld [vmem:[%s3 + $0x238] sm:$0xff]
  %v232 = vld [vmem:[%s3 + $0x240] sm:$0xff]
  %v233 = vld [vmem:[%s3 + $0x248] sm:$0xff]
  %v234 = vld [vmem:[%s3 + $0x250] sm:$0xff]
  %v235 = vld [vmem:[%s3 + $0x258] sm:$0xff]
  %v236 = vld [vmem:[%s3 + $0x260] sm:$0xff]
  %v237 = vld [vmem:[%s3 + $0x268] sm:$0xff]
  %v238 = vld [vmem:[%s3 + $0x270] sm:$0xff]
  %v239 = vld [vmem:[%s3 + $0x278] sm:$0xff]
  %v240 = vld [vmem:[%s3 + $0x280] sm:$0xff]
  %v241 = vld [vmem:[%s3 + $0x288] sm:$0xff]
  %v242 = vld [vmem:[%s3 + $0x290] sm:$0xff]
  %v243 = vld [vmem:[%s3 + $0x298] sm:$0xff]
  %v244 = vld [vmem:[%s3 + $0x2a0] sm:$0xff]
  %v245 = vld [vmem:[%s3 + $0x2a8] sm:$0xff]
  %v246 = vld [vmem:[%s3 + $0x2b0] sm:$0xff]
  %v247 = vld [vmem:[%s3 + $0x2b8] sm:$0xff]
  %v248 = vld [vmem:[%s3 + $0x2c0] sm:$0xff]
  %v249 = vld [vmem:[%s3 + $0x2c8] sm:$0xff]
  %v250 = vld [vmem:[%s3 + $0x2d0] sm:$0xff]
  %v251 = vld [vmem:[%s3 + $0x2d8] sm:$0xff]
  %v252 = vld [vmem:[%s3 + $0x2e0] sm:$0xff]
  %v253 = vld [vmem:[%s3 + $0x2e8] sm:$0xff]
  %v254 = vld [vmem:[%s3 + $0x2f0] sm:$0xff]
  %v255 = vld [vmem:[%s3 + $0x2f8] sm:$0xff]
  %v256 = vld [vmem:[%s3 + $0x300] sm:$0xff]
  %v257 = vld [vmem:[%s3 + $0x308] sm:$0xff]
  %v258 = vld [vmem:[%s3 + $0x310] sm:$0xff]
  %v259 = vld [vmem:[%s3 + $0x318] sm:$0xff]
  %v260 = vld [vmem:[%s3 + $0x320] sm:$0xff]
  %v261 = vld [vmem:[%s3 + $0x328] sm:$0xff]
  %v262 = vld [vmem:[%s3 + $0x330] sm:$0xff]
  %v263 = vld [vmem:[%s3 + $0x338] sm:$0xff]
  %v264 = vld [vmem:[%s3 + $0x340] sm:$0xff]
  %v265 = vld [vmem:[%s3 + $0x348] sm:$0xff]
  %v266 = vld [vmem:[%s3 + $0x350] sm:$0xff]
  %v267 = vld [vmem:[%s3 + $0x358] sm:$0xff]
  %v268 = vld [vmem:[%s3 + $0x360] sm:$0xff]
  %v269 = vld [vmem:[%s3 + $0x368] sm:$0xff]
  %v270 = vld [vmem:[%s3 + $0x370] sm:$0xff]
  %v271 = vld [vmem:[%s3 + $0x378] sm:$0xff]
  %v272 = vld [vmem:[%s3 + $0x380] sm:$0xff]
  %v273 = vld [vmem:[%s3 + $0x388] sm:$0xff]
  %v274 = vld [vmem:[%s3 + $0x390] sm:$0xff]
  %v275 = vld [vmem:[%s3 + $0x398] sm:$0xff]
  %v276 = vld [vmem:[%s3 + $0x3a0] sm:$0xff]
  %v277 = vld [vmem:[%s3 + $0x3a8] sm:$0xff]
  %v278 = vld [vmem:[%s3 + $0x3b0] sm:$0xff]
  %v279 = vld [vmem:[%s3 + $0x3b8] sm:$0xff]
  %v280 = vld [vmem:[%s3 + $0x3c0] sm:$0xff]
  %v281 = vld [vmem:[%s3 + $0x3c8] sm:$0xff]
  %v282 = vld [vmem:[%s3 + $0x3d0] sm:$0xff]
  %v283 = vld [vmem:[%s3 + $0x3d8] sm:$0xff]
  %v284 = vld [vmem:[%s3 + $0x3e0] sm:$0xff]
  %v285 = vld [vmem:[%s3 + $0x3e8] sm:$0xff]
  %v286 = vld [vmem:[%s3 + $0x3f0] sm:$0xff]
  %v287 = vld [vmem:[%s3 + $0x3f8] sm:$0xff]
  %v288 = vld [vmem:[%s4] sm:$0x3]
  %v290 = vlaneseq
  %v291 = vshrl.u32 %v290, 7
  %v292 = vsub.s32 0, %v291
  %v293 = vrot.slane %v288, %v292
  %v294 = vlaneseq
  %v295 = vshrl.u32 %v294, 7
  %v296 = vsub.s32 1, %v295
  %v297 = vrot.slane %v288, %v296
  %300 = vmatprep.subr.mxu0 %v161
  %301 = vmatpush1.msra.mxu0 %v160
  %302 = vmatprep.subr.mxu0 %v163
  %303 = vmatpush1.msra.mxu0 %v162
  %304 = vmatprep.subr.mxu0 %v165
  %305 = vmatpush1.msra.mxu0 %v164
  %306 = vmatprep.subr.mxu0 %v167
  %307 = vmatpush1.msra.mxu0 %v166
  %308 = vmatprep.subr.mxu0 %v169
  %309 = vmatpush1.msra.mxu0 %v168
  %310 = vmatprep.subr.mxu0 %v171
  %311 = vmatpush1.msra.mxu0 %v170
  %312 = vmatprep.subr.mxu0 %v173
  %313 = vmatpush1.msra.mxu0 %v172
  %314 = vmatprep.subr.mxu0 %v175
  %315 = vmatpush1.msra.mxu0 %v174
  %316 = vmatprep.subr.mxu0 %v177
  %317 = vmatpush1.msra.mxu0 %v176
  %318 = vmatprep.subr.mxu0 %v179
  %319 = vmatpush1.msra.mxu0 %v178
  %320 = vmatprep.subr.mxu0 %v181
  %321 = vmatpush1.msra.mxu0 %v180
  %322 = vmatprep.subr.mxu0 %v183
  %323 = vmatpush1.msra.mxu0 %v182
  %324 = vmatprep.subr.mxu0 %v185
  %325 = vmatpush1.msra.mxu0 %v184
  %326 = vmatprep.subr.mxu0 %v187
  %327 = vmatpush1.msra.mxu0 %v186
  %328 = vmatprep.subr.mxu0 %v189
  %329 = vmatpush1.msra.mxu0 %v188
  %330 = vmatprep.subr.mxu0 %v191
  %331 = vmatpush1.msra.mxu0 %v190
  %332 = vmatprep.subr.mxu0 %v193
  %333 = vmatpush1.msra.mxu0 %v192
  %334 = vmatprep.subr.mxu0 %v195
  %335 = vmatpush1.msra.mxu0 %v194
  %336 = vmatprep.subr.mxu0 %v197
  %337 = vmatpush1.msra.mxu0 %v196
  %338 = vmatprep.subr.mxu0 %v199
  %339 = vmatpush1.msra.mxu0 %v198
  %340 = vmatprep.subr.mxu0 %v201
  %341 = vmatpush1.msra.mxu0 %v200
  %342 = vmatprep.subr.mxu0 %v203
  %343 = vmatpush1.msra.mxu0 %v202
  %344 = vmatprep.subr.mxu0 %v205
  %345 = vmatpush1.msra.mxu0 %v204
  %346 = vmatprep.subr.mxu0 %v207
  %347 = vmatpush1.msra.mxu0 %v206
  %348 = vmatprep.subr.mxu0 %v209
  %349 = vmatpush1.msra.mxu0 %v208
  %350 = vmatprep.subr.mxu0 %v211
  %351 = vmatpush1.msra.mxu0 %v210
  %352 = vmatprep.subr.mxu0 %v213
  %353 = vmatpush1.msra.mxu0 %v212
  %354 = vmatprep.subr.mxu0 %v215
  %355 = vmatpush1.msra.mxu0 %v214
  %356 = vmatprep.subr.mxu0 %v217
  %357 = vmatpush1.msra.mxu0 %v216
  %358 = vmatprep.subr.mxu0 %v219
  %359 = vmatpush1.msra.mxu0 %v218
  %360 = vmatprep.subr.mxu0 %v221
  %361 = vmatpush1.msra.mxu0 %v220
  %362 = vmatprep.subr.mxu0 %v223
  %363 = vmatpush1.msra.mxu0 %v222
  %364 = vmatprep.mubr.f32.mxu0 %v153
  %365 = vmatmul.mubr.f32.gmra.mrb[0].mxu0 %v152
  %v366 = vpop.f32.mrb[0].mxu0
  %v367 = vadd.f32 %v293, %v366
  %v368 = vpop.f32.mrb[0].mxu0
  %v369 = vadd.f32 %v297, %v368
  %370 = vmatprep.mubr.f32.mxu0 %v157
  %371 = vmatmul.mubr.f32.gmra.mrb[0].mxu0 %v156
  %v372 = vpop.f32.mrb[0].mxu0
  %v373 = vadd.f32 %v293, %v372
  %v374 = vpop.f32.mrb[0].mxu0
  %v375 = vadd.f32 %v297, %v374
  %376 = vdwg.mxu0
  %377 = vmatprep.subr.mxu0 %v225
  %378 = vmatpush1.msra.mxu0 %v224
  %379 = vmatprep.subr.mxu0 %v227
  %380 = vmatpush1.msra.mxu0 %v226
  %381 = vmatprep.subr.mxu0 %v229
  %382 = vmatpush1.msra.mxu0 %v228
  %383 = vmatprep.subr.mxu0 %v231
  %384 = vmatpush1.msra.mxu0 %v230
  %385 = vmatprep.subr.mxu0 %v233
  %386 = vmatpush1.msra.mxu0 %v232
  %387 = vmatprep.subr.mxu0 %v235
  %388 = vmatpush1.msra.mxu0 %v234
  %389 = vmatprep.subr.mxu0 %v237
  %390 = vmatpush1.msra.mxu0 %v236
  %391 = vmatprep.subr.mxu0 %v239
  %392 = vmatpush1.msra.mxu0 %v238
  %393 = vmatprep.subr.mxu0 %v241
  %394 = vmatpush1.msra.mxu0 %v240
  %395 = vmatprep.subr.mxu0 %v243
  %396 = vmatpush1.msra.mxu0 %v242
  %397 = vmatprep.subr.mxu0 %v245
  %398 = vmatpush1.msra.mxu0 %v244
  %399 = vmatprep.subr.mxu0 %v247
  %400 = vmatpush1.msra.mxu0 %v246
  %401 = vmatprep.subr.mxu0 %v249
  %402 = vmatpush1.msra.mxu0 %v248
  %403 = vmatprep.subr.mxu0 %v251
  %404 = vmatpush1.msra.mxu0 %v250
  %405 = vmatprep.subr.mxu0 %v253
  %406 = vmatpush1.msra.mxu0 %v252
  %407 = vmatprep.subr.mxu0 %v255
  %408 = vmatpush1.msra.mxu0 %v254
  %409 = vmatprep.subr.mxu0 %v257
  %410 = vmatpush1.msra.mxu0 %v256
  %411 = vmatprep.subr.mxu0 %v259
  %412 = vmatpush1.msra.mxu0 %v258
  %413 = vmatprep.subr.mxu0 %v261
  %414 = vmatpush1.msra.mxu0 %v260
  %415 = vmatprep.subr.mxu0 %v263
  %416 = vmatpush1.msra.mxu0 %v262
  %417 = vmatprep.subr.mxu0 %v265
  %418 = vmatpush1.msra.mxu0 %v264
  %419 = vmatprep.subr.mxu0 %v267
  %420 = vmatpush1.msra.mxu0 %v266
  %421 = vmatprep.subr.mxu0 %v269
  %422 = vmatpush1.msra.mxu0 %v268
  %423 = vmatprep.subr.mxu0 %v271
  %424 = vmatpush1.msra.mxu0 %v270
  %425 = vmatprep.subr.mxu0 %v273
  %426 = vmatpush1.msra.mxu0 %v272
  %427 = vmatprep.subr.mxu0 %v275
  %428 = vmatpush1.msra.mxu0 %v274
  %429 = vmatprep.subr.mxu0 %v277
  %430 = vmatpush1.msra.mxu0 %v276
  %431 = vmatprep.subr.mxu0 %v279
  %432 = vmatpush1.msra.mxu0 %v278
  %433 = vmatprep.subr.mxu0 %v281
  %434 = vmatpush1.msra.mxu0 %v280
  %435 = vmatprep.subr.mxu0 %v283
  %436 = vmatpush1.msra.mxu0 %v282
  %437 = vmatprep.subr.mxu0 %v285
  %438 = vmatpush1.msra.mxu0 %v284
  %439 = vmatprep.subr.mxu0 %v287
  %440 = vmatpush1.msra.mxu0 %v286
  %441 = vmatprep.mubr.f32.mxu0 %v155
  %442 = vmatmul.mubr.f32.gmra.mrb[0].mxu0 %v154
  %v443 = vpop.f32.mrb[0].mxu0
  %v444 = vadd.f32 %v367, %v443
  %v445 = vpop.f32.mrb[0].mxu0
  %v446 = vadd.f32 %v369, %v445
  %447 = vmatprep.mubr.f32.mxu0 %v159
  %448 = vmatmul.mubr.f32.gmra.mrb[0].mxu0 %v158
  %v449 = vpop.f32.mrb[0].mxu0
  %v450 = vadd.f32 %v373, %v449
  %v451 = vpop.f32.mrb[0].mxu0
  %v452 = vadd.f32 %v375, %v451
  %453 = vdwg.mxu0
  %v454 = vmax.f32 %v444, 0.0
  %v455 = vmax.f32 %v446, 0.0
  %v456 = vmax.f32 %v450, 0.0
  %v457 = vmax.f32 %v452, 0.0
  %v458 = vld [vmem:[%s5] sm:$0x3]
  %v460 = vlaneseq
  %v461 = vshrl.u32 %v460, 7
  %v462 = vsub.s32 0, %v461
  %v463 = vrot.slane %v458, %v462
  %v464 = vlaneseq
  %v465 = vshrl.u32 %v464, 7
  %v466 = vsub.s32 1, %v465
  %v467 = vrot.slane %v458, %v466
  %v470 = vmul.f32 %v454, %v463
  %v471 = vmul.f32 %v455, %v467
  %v472 = vmul.f32 %v456, %v463
  %v473 = vmul.f32 %v457, %v467
  %v474 = vadd.f32 %v470, %v471
  %475 = vadd.xlane.f32.xlu0 %v474
  %v476 = vpop.xlane.xlu0 %475
  %vm477 = vcmask 1040384
  %v478 = vsel %vm477, %v472, 0.0
  %v479 = vsel %vm477, %v473, 0.0
  %v480 = vadd.f32 %v478, %v479
  %481 = vadd.xlane.f32.xlu0 %v480
  %v482 = vpop.xlane.xlu0 %481
  %v483 = vld [vmem:[#allocation2] sm:$0x1]
  %v485 = vlaneseq
  %v486 = vshrl.u32 %v485, 7
  %v487 = vsub.s32 0, %v486
  %v488 = vrot.slane %v483, %v487
  %v490 = vadd.f32 %v476, %v488
  %v491 = vadd.f32 %v482, %v488
  %v492 = vld [vmem:[%s7] sm:$0xff]
  %493 = vset.pattern.permute.xlu0 0
  %494 = vperm.xlu0 %493, %v80
  %v495 = vpop.permute.xlu0 %494
  %497 = vset.pattern.permute.xlu0 0
  %498 = vperm.xlu0 %497, %v81
  %v499 = vpop.permute.xlu0 %498
  %v502 = vlaneseq
  %v503 = vshrl.u32 %v502, 7
  %v504 = vsub.s32 0, %v503
  %v505 = vrot.slane %v492, %v504
  %v506 = vlaneseq
  %v507 = vshrl.u32 %v506, 7
  %v508 = vsub.s32 2, %v507
  %v509 = vrot.slane %v492, %v508
  %v510 = vlaneseq
  %v511 = vshrl.u32 %v510, 7
  %v512 = vsub.s32 4, %v511
  %v513 = vrot.slane %v492, %v512
  %v514 = vlaneseq
  %v515 = vshrl.u32 %v514, 7
  %v516 = vsub.s32 6, %v515
  %v517 = vrot.slane %v492, %v516
  %v522 = vlaneseq
  %v523 = vshrl.u32 %v522, 7
  %v524 = vsub.s32 0, %v523
  %v525 = vrot.slane %v505, %v524
  %v526 = vlaneseq
  %v527 = vshrl.u32 %v526, 7
  %v528 = vsub.s32 0, %v527
  %v529 = vrot.slane %v509, %v528
  %v530 = vlaneseq
  %v531 = vshrl.u32 %v530, 7
  %v532 = vsub.s32 0, %v531
  %v533 = vrot.slane %v513, %v532
  %v534 = vlaneseq
  %v535 = vshrl.u32 %v534, 7
  %v536 = vsub.s32 0, %v535
  %v537 = vrot.slane %v517, %v536
  %v538 = vmul.f32 %v495, %v525
  %v539 = vmul.f32 %v495, %v529
  %v540 = vmul.f32 %v495, %v533
  %v541 = vmul.f32 %v495, %v537
  %v542 = vmul.f32 %v499, %v525
  %v543 = vmul.f32 %v499, %v529
  %v544 = vmul.f32 %v499, %v533
  %v545 = vmul.f32 %v499, %v537
  %547 = vset.pattern.permute.xlu0 0
  %548 = vperm.xlu0 %547, %v490
  %v549 = vpop.permute.xlu0 %548
  %552 = vset.pattern.permute.xlu0 0
  %553 = vperm.xlu0 %552, %v491
  %v554 = vpop.permute.xlu0 %553
  %v556 = vlaneseq
  %v557 = vshrl.u32 %v556, 7
  %v558 = vsub.s32 1, %v557
  %v559 = vrot.slane %v492, %v558
  %v560 = vlaneseq
  %v561 = vshrl.u32 %v560, 7
  %v562 = vsub.s32 3, %v561
  %v563 = vrot.slane %v492, %v562
  %v564 = vlaneseq
  %v565 = vshrl.u32 %v564, 7
  %v566 = vsub.s32 5, %v565
  %v567 = vrot.slane %v492, %v566
  %v568 = vlaneseq
  %v569 = vshrl.u32 %v568, 7
  %v570 = vsub.s32 7, %v569
  %v571 = vrot.slane %v492, %v570
  %v576 = vlaneseq
  %v577 = vshrl.u32 %v576, 7
  %v578 = vsub.s32 1, %v577
  %v579 = vrot.slane %v559, %v578
  %v580 = vlaneseq
  %v581 = vshrl.u32 %v580, 7
  %v582 = vsub.s32 1, %v581
  %v583 = vrot.slane %v563, %v582
  %v584 = vlaneseq
  %v585 = vshrl.u32 %v584, 7
  %v586 = vsub.s32 1, %v585
  %v587 = vrot.slane %v567, %v586
  %v588 = vlaneseq
  %v589 = vshrl.u32 %v588, 7
  %v590 = vsub.s32 1, %v589
  %v591 = vrot.slane %v571, %v590
  %v592 = vmul.f32 %v549, %v579
  %v593 = vmul.f32 %v549, %v583
  %v594 = vmul.f32 %v549, %v587
  %v595 = vmul.f32 %v549, %v591
  %v596 = vmul.f32 %v554, %v579
  %v597 = vmul.f32 %v554, %v583
  %v598 = vmul.f32 %v554, %v587
  %v599 = vmul.f32 %v554, %v591
  %v600 = vadd.f32 %v538, %v592
  %v601 = vadd.f32 %v539, %v593
  %v602 = vadd.f32 %v540, %v594
  %v603 = vadd.f32 %v541, %v595
  %v604 = vadd.f32 %v542, %v596
  %v605 = vadd.f32 %v543, %v597
  %v606 = vadd.f32 %v544, %v598
  %v607 = vadd.f32 %v545, %v599
  %v608 = vld [vmem:[%s8] sm:$0xf]
  %v610 = vlaneseq
  %v611 = vshrl.u32 %v610, 7
  %v612 = vsub.s32 0, %v611
  %v613 = vrot.slane %v608, %v612
  %v614 = vlaneseq
  %v615 = vshrl.u32 %v614, 7
  %v616 = vsub.s32 1, %v615
  %v617 = vrot.slane %v608, %v616
  %v618 = vlaneseq
  %v619 = vshrl.u32 %v618, 7
  %v620 = vsub.s32 2, %v619
  %v621 = vrot.slane %v608, %v620
  %v622 = vlaneseq
  %v623 = vshrl.u32 %v622, 7
  %v624 = vsub.s32 3, %v623
  %v625 = vrot.slane %v608, %v624
  %v630 = vadd.f32 %v600, %v613
  %v631 = vadd.f32 %v601, %v617
  %v632 = vadd.f32 %v602, %v621
  %v633 = vadd.f32 %v603, %v625
  %v634 = vadd.f32 %v604, %v613
  %v635 = vadd.f32 %v605, %v617
  %v636 = vadd.f32 %v606, %v621
  %v637 = vadd.f32 %v607, %v625
  %v638 = vmax.f32 %v630, 0.0
  %v639 = vmax.f32 %v631, 0.0
  %v640 = vmax.f32 %v632, 0.0
  %v641 = vmax.f32 %v633, 0.0
  %v642 = vmax.f32 %v634, 0.0
  %v643 = vmax.f32 %v635, 0.0
  %v644 = vmax.f32 %v636, 0.0
  %v645 = vmax.f32 %v637, 0.0
  %v646 = vld [vmem:[%s9] sm:$0xff]
  %v647 = vld [vmem:[%s9 + $0x8] sm:$0xff]
  %v648 = vld [vmem:[%s9 + $0x10] sm:$0xff]
  %v649 = vld [vmem:[%s9 + $0x18] sm:$0xff]
  %v650 = vld [vmem:[%s9 + $0x20] sm:$0xff]
  %v651 = vld [vmem:[%s9 + $0x28] sm:$0xff]
  %v652 = vld [vmem:[%s9 + $0x30] sm:$0xff]
  %v653 = vld [vmem:[%s9 + $0x38] sm:$0xff]
  %v654 = vld [vmem:[%s9 + $0x40] sm:$0xff]
  %v655 = vld [vmem:[%s9 + $0x48] sm:$0xff]
  %v656 = vld [vmem:[%s9 + $0x50] sm:$0xff]
  %v657 = vld [vmem:[%s9 + $0x58] sm:$0xff]
  %v658 = vld [vmem:[%s9 + $0x60] sm:$0xff]
  %v659 = vld [vmem:[%s9 + $0x68] sm:$0xff]
  %v660 = vld [vmem:[%s9 + $0x70] sm:$0xff]
  %v661 = vld [vmem:[%s9 + $0x78] sm:$0xff]
  %v662 = vld [vmem:[%s9 + $0x80] sm:$0xff]
  %v663 = vld [vmem:[%s9 + $0x88] sm:$0xff]
  %v664 = vld [vmem:[%s9 + $0x90] sm:$0xff]
  %v665 = vld [vmem:[%s9 + $0x98] sm:$0xff]
  %v666 = vld [vmem:[%s9 + $0xa0] sm:$0xff]
  %v667 = vld [vmem:[%s9 + $0xa8] sm:$0xff]
  %v668 = vld [vmem:[%s9 + $0xb0] sm:$0xff]
  %v669 = vld [vmem:[%s9 + $0xb8] sm:$0xff]
  %v670 = vld [vmem:[%s9 + $0xc0] sm:$0xff]
  %v671 = vld [vmem:[%s9 + $0xc8] sm:$0xff]
  %v672 = vld [vmem:[%s9 + $0xd0] sm:$0xff]
  %v673 = vld [vmem:[%s9 + $0xd8] sm:$0xff]
  %v674 = vld [vmem:[%s9 + $0xe0] sm:$0xff]
  %v675 = vld [vmem:[%s9 + $0xe8] sm:$0xff]
  %v676 = vld [vmem:[%s9 + $0xf0] sm:$0xff]
  %v677 = vld [vmem:[%s9 + $0xf8] sm:$0xff]
  %v678 = vld [vmem:[%s9 + $0x100] sm:$0xff]
  %v679 = vld [vmem:[%s9 + $0x108] sm:$0xff]
  %v680 = vld [vmem:[%s9 + $0x110] sm:$0xff]
  %v681 = vld [vmem:[%s9 + $0x118] sm:$0xff]
  %v682 = vld [vmem:[%s9 + $0x120] sm:$0xff]
  %v683 = vld [vmem:[%s9 + $0x128] sm:$0xff]
  %v684 = vld [vmem:[%s9 + $0x130] sm:$0xff]
  %v685 = vld [vmem:[%s9 + $0x138] sm:$0xff]
  %v686 = vld [vmem:[%s9 + $0x140] sm:$0xff]
  %v687 = vld [vmem:[%s9 + $0x148] sm:$0xff]
  %v688 = vld [vmem:[%s9 + $0x150] sm:$0xff]
  %v689 = vld [vmem:[%s9 + $0x158] sm:$0xff]
  %v690 = vld [vmem:[%s9 + $0x160] sm:$0xff]
  %v691 = vld [vmem:[%s9 + $0x168] sm:$0xff]
  %v692 = vld [vmem:[%s9 + $0x170] sm:$0xff]
  %v693 = vld [vmem:[%s9 + $0x178] sm:$0xff]
  %v694 = vld [vmem:[%s9 + $0x180] sm:$0xff]
  %v695 = vld [vmem:[%s9 + $0x188] sm:$0xff]
  %v696 = vld [vmem:[%s9 + $0x190] sm:$0xff]
  %v697 = vld [vmem:[%s9 + $0x198] sm:$0xff]
  %v698 = vld [vmem:[%s9 + $0x1a0] sm:$0xff]
  %v699 = vld [vmem:[%s9 + $0x1a8] sm:$0xff]
  %v700 = vld [vmem:[%s9 + $0x1b0] sm:$0xff]
  %v701 = vld [vmem:[%s9 + $0x1b8] sm:$0xff]
  %v702 = vld [vmem:[%s9 + $0x1c0] sm:$0xff]
  %v703 = vld [vmem:[%s9 + $0x1c8] sm:$0xff]
  %v704 = vld [vmem:[%s9 + $0x1d0] sm:$0xff]
  %v705 = vld [vmem:[%s9 + $0x1d8] sm:$0xff]
  %v706 = vld [vmem:[%s9 + $0x1e0] sm:$0xff]
  %v707 = vld [vmem:[%s9 + $0x1e8] sm:$0xff]
  %v708 = vld [vmem:[%s9 + $0x1f0] sm:$0xff]
  %v709 = vld [vmem:[%s9 + $0x1f8] sm:$0xff]
  %v710 = vld [vmem:[%s9 + $0x200] sm:$0xff]
  %v711 = vld [vmem:[%s9 + $0x208] sm:$0xff]
  %v712 = vld [vmem:[%s9 + $0x210] sm:$0xff]
  %v713 = vld [vmem:[%s9 + $0x218] sm:$0xff]
  %v714 = vld [vmem:[%s9 + $0x220] sm:$0xff]
  %v715 = vld [vmem:[%s9 + $0x228] sm:$0xff]
  %v716 = vld [vmem:[%s9 + $0x230] sm:$0xff]
  %v717 = vld [vmem:[%s9 + $0x238] sm:$0xff]
  %v718 = vld [vmem:[%s9 + $0x240] sm:$0xff]
  %v719 = vld [vmem:[%s9 + $0x248] sm:$0xff]
  %v720 = vld [vmem:[%s9 + $0x250] sm:$0xff]
  %v721 = vld [vmem:[%s9 + $0x258] sm:$0xff]
  %v722 = vld [vmem:[%s9 + $0x260] sm:$0xff]
  %v723 = vld [vmem:[%s9 + $0x268] sm:$0xff]
  %v724 = vld [vmem:[%s9 + $0x270] sm:$0xff]
  %v725 = vld [vmem:[%s9 + $0x278] sm:$0xff]
  %v726 = vld [vmem:[%s9 + $0x280] sm:$0xff]
  %v727 = vld [vmem:[%s9 + $0x288] sm:$0xff]
  %v728 = vld [vmem:[%s9 + $0x290] sm:$0xff]
  %v729 = vld [vmem:[%s9 + $0x298] sm:$0xff]
  %v730 = vld [vmem:[%s9 + $0x2a0] sm:$0xff]
  %v731 = vld [vmem:[%s9 + $0x2a8] sm:$0xff]
  %v732 = vld [vmem:[%s9 + $0x2b0] sm:$0xff]
  %v733 = vld [vmem:[%s9 + $0x2b8] sm:$0xff]
  %v734 = vld [vmem:[%s9 + $0x2c0] sm:$0xff]
  %v735 = vld [vmem:[%s9 + $0x2c8] sm:$0xff]
  %v736 = vld [vmem:[%s9 + $0x2d0] sm:$0xff]
  %v737 = vld [vmem:[%s9 + $0x2d8] sm:$0xff]
  %v738 = vld [vmem:[%s9 + $0x2e0] sm:$0xff]
  %v739 = vld [vmem:[%s9 + $0x2e8] sm:$0xff]
  %v740 = vld [vmem:[%s9 + $0x2f0] sm:$0xff]
  %v741 = vld [vmem:[%s9 + $0x2f8] sm:$0xff]
  %v742 = vld [vmem:[%s9 + $0x300] sm:$0xff]
  %v743 = vld [vmem:[%s9 + $0x308] sm:$0xff]
  %v744 = vld [vmem:[%s9 + $0x310] sm:$0xff]
  %v745 = vld [vmem:[%s9 + $0x318] sm:$0xff]
  %v746 = vld [vmem:[%s9 + $0x320] sm:$0xff]
  %v747 = vld [vmem:[%s9 + $0x328] sm:$0xff]
  %v748 = vld [vmem:[%s9 + $0x330] sm:$0xff]
  %v749 = vld [vmem:[%s9 + $0x338] sm:$0xff]
  %v750 = vld [vmem:[%s9 + $0x340] sm:$0xff]
  %v751 = vld [vmem:[%s9 + $0x348] sm:$0xff]
  %v752 = vld [vmem:[%s9 + $0x350] sm:$0xff]
  %v753 = vld [vmem:[%s9 + $0x358] sm:$0xff]
  %v754 = vld [vmem:[%s9 + $0x360] sm:$0xff]
  %v755 = vld [vmem:[%s9 + $0x368] sm:$0xff]
  %v756 = vld [vmem:[%s9 + $0x370] sm:$0xff]
  %v757 = vld [vmem:[%s9 + $0x378] sm:$0xff]
  %v758 = vld [vmem:[%s9 + $0x380] sm:$0xff]
  %v759 = vld [vmem:[%s9 + $0x388] sm:$0xff]
  %v760 = vld [vmem:[%s9 + $0x390] sm:$0xff]
  %v761 = vld [vmem:[%s9 + $0x398] sm:$0xff]
  %v762 = vld [vmem:[%s9 + $0x3a0] sm:$0xff]
  %v763 = vld [vmem:[%s9 + $0x3a8] sm:$0xff]
  %v764 = vld [vmem:[%s9 + $0x3b0] sm:$0xff]
  %v765 = vld [vmem:[%s9 + $0x3b8] sm:$0xff]
  %v766 = vld [vmem:[%s9 + $0x3c0] sm:$0xff]
  %v767 = vld [vmem:[%s9 + $0x3c8] sm:$0xff]
  %v768 = vld [vmem:[%s9 + $0x3d0] sm:$0xff]
  %v769 = vld [vmem:[%s9 + $0x3d8] sm:$0xff]
  %v770 = vld [vmem:[%s9 + $0x3e0] sm:$0xff]
  %v771 = vld [vmem:[%s9 + $0x3e8] sm:$0xff]
  %v772 = vld [vmem:[%s9 + $0x3f0] sm:$0xff]
  %v773 = vld [vmem:[%s9 + $0x3f8] sm:$0xff]
  %v774 = vld [vmem:[%s10] sm:$0x3]
  %v776 = vlaneseq
  %v777 = vshrl.u32 %v776, 7
  %v778 = vsub.s32 0, %v777
  %v779 = vrot.slane %v774, %v778
  %v780 = vlaneseq
  %v781 = vshrl.u32 %v780, 7
  %v782 = vsub.s32 1, %v781
  %v783 = vrot.slane %v774, %v782
  %786 = vmatprep.subr.mxu0 %v647
  %787 = vmatpush1.msra.mxu0 %v646
  %788 = vmatprep.subr.mxu0 %v649
  %789 = vmatpush1.msra.mxu0 %v648
  %790 = vmatprep.subr.mxu0 %v651
  %791 = vmatpush1.msra.mxu0 %v650
  %792 = vmatprep.subr.mxu0 %v653
  %793 = vmatpush1.msra.mxu0 %v652
  %794 = vmatprep.subr.mxu0 %v655
  %795 = vmatpush1.msra.mxu0 %v654
  %796 = vmatprep.subr.mxu0 %v657
  %797 = vmatpush1.msra.mxu0 %v656
  %798 = vmatprep.subr.mxu0 %v659
  %799 = vmatpush1.msra.mxu0 %v658
  %800 = vmatprep.subr.mxu0 %v661
  %801 = vmatpush1.msra.mxu0 %v660
  %802 = vmatprep.subr.mxu0 %v663
  %803 = vmatpush1.msra.mxu0 %v662
  %804 = vmatprep.subr.mxu0 %v665
  %805 = vmatpush1.msra.mxu0 %v664
  %806 = vmatprep.subr.mxu0 %v667
  %807 = vmatpush1.msra.mxu0 %v666
  %808 = vmatprep.subr.mxu0 %v669
  %809 = vmatpush1.msra.mxu0 %v668
  %810 = vmatprep.subr.mxu0 %v671
  %811 = vmatpush1.msra.mxu0 %v670
  %812 = vmatprep.subr.mxu0 %v673
  %813 = vmatpush1.msra.mxu0 %v672
  %814 = vmatprep.subr.mxu0 %v675
  %815 = vmatpush1.msra.mxu0 %v674
  %816 = vmatprep.subr.mxu0 %v677
  %817 = vmatpush1.msra.mxu0 %v676
  %818 = vmatprep.subr.mxu0 %v679
  %819 = vmatpush1.msra.mxu0 %v678
  %820 = vmatprep.subr.mxu0 %v681
  %821 = vmatpush1.msra.mxu0 %v680
  %822 = vmatprep.subr.mxu0 %v683
  %823 = vmatpush1.msra.mxu0 %v682
  %824 = vmatprep.subr.mxu0 %v685
  %825 = vmatpush1.msra.mxu0 %v684
  %826 = vmatprep.subr.mxu0 %v687
  %827 = vmatpush1.msra.mxu0 %v686
  %828 = vmatprep.subr.mxu0 %v689
  %829 = vmatpush1.msra.mxu0 %v688
  %830 = vmatprep.subr.mxu0 %v691
  %831 = vmatpush1.msra.mxu0 %v690
  %832 = vmatprep.subr.mxu0 %v693
  %833 = vmatpush1.msra.mxu0 %v692
  %834 = vmatprep.subr.mxu0 %v695
  %835 = vmatpush1.msra.mxu0 %v694
  %836 = vmatprep.subr.mxu0 %v697
  %837 = vmatpush1.msra.mxu0 %v696
  %838 = vmatprep.subr.mxu0 %v699
  %839 = vmatpush1.msra.mxu0 %v698
  %840 = vmatprep.subr.mxu0 %v701
  %841 = vmatpush1.msra.mxu0 %v700
  %842 = vmatprep.subr.mxu0 %v703
  %843 = vmatpush1.msra.mxu0 %v702
  %844 = vmatprep.subr.mxu0 %v705
  %845 = vmatpush1.msra.mxu0 %v704
  %846 = vmatprep.subr.mxu0 %v707
  %847 = vmatpush1.msra.mxu0 %v706
  %848 = vmatprep.subr.mxu0 %v709
  %849 = vmatpush1.msra.mxu0 %v708
  %850 = vmatprep.mubr.f32.mxu0 %v639
  %851 = vmatmul.mubr.f32.gmra.mrb[0].mxu0 %v638
  %v852 = vpop.f32.mrb[0].mxu0
  %v853 = vadd.f32 %v779, %v852
  %v854 = vpop.f32.mrb[0].mxu0
  %v855 = vadd.f32 %v783, %v854
  %856 = vmatprep.mubr.f32.mxu0 %v643
  %857 = vmatmul.mubr.f32.gmra.mrb[0].mxu0 %v642
  %v858 = vpop.f32.mrb[0].mxu0
  %v859 = vadd.f32 %v779, %v858
  %v860 = vpop.f32.mrb[0].mxu0
  %v861 = vadd.f32 %v783, %v860
  %862 = vdwg.mxu0
  %863 = vmatprep.subr.mxu0 %v711
  %864 = vmatpush1.msra.mxu0 %v710
  %865 = vmatprep.subr.mxu0 %v713
  %866 = vmatpush1.msra.mxu0 %v712
  %867 = vmatprep.subr.mxu0 %v715
  %868 = vmatpush1.msra.mxu0 %v714
  %869 = vmatprep.subr.mxu0 %v717
  %870 = vmatpush1.msra.mxu0 %v716
  %871 = vmatprep.subr.mxu0 %v719
  %872 = vmatpush1.msra.mxu0 %v718
  %873 = vmatprep.subr.mxu0 %v721
  %874 = vmatpush1.msra.mxu0 %v720
  %875 = vmatprep.subr.mxu0 %v723
  %876 = vmatpush1.msra.mxu0 %v722
  %877 = vmatprep.subr.mxu0 %v725
  %878 = vmatpush1.msra.mxu0 %v724
  %879 = vmatprep.subr.mxu0 %v727
  %880 = vmatpush1.msra.mxu0 %v726
  %881 = vmatprep.subr.mxu0 %v729
  %882 = vmatpush1.msra.mxu0 %v728
  %883 = vmatprep.subr.mxu0 %v731
  %884 = vmatpush1.msra.mxu0 %v730
  %885 = vmatprep.subr.mxu0 %v733
  %886 = vmatpush1.msra.mxu0 %v732
  %887 = vmatprep.subr.mxu0 %v735
  %888 = vmatpush1.msra.mxu0 %v734
  %889 = vmatprep.subr.mxu0 %v737
  %890 = vmatpush1.msra.mxu0 %v736
  %891 = vmatprep.subr.mxu0 %v739
  %892 = vmatpush1.msra.mxu0 %v738
  %893 = vmatprep.subr.mxu0 %v741
  %894 = vmatpush1.msra.mxu0 %v740
  %895 = vmatprep.subr.mxu0 %v743
  %896 = vmatpush1.msra.mxu0 %v742
  %897 = vmatprep.subr.mxu0 %v745
  %898 = vmatpush1.msra.mxu0 %v744
  %899 = vmatprep.subr.mxu0 %v747
  %900 = vmatpush1.msra.mxu0 %v746
  %901 = vmatprep.subr.mxu0 %v749
  %902 = vmatpush1.msra.mxu0 %v748
  %903 = vmatprep.subr.mxu0 %v751
  %904 = vmatpush1.msra.mxu0 %v750
  %905 = vmatprep.subr.mxu0 %v753
  %906 = vmatpush1.msra.mxu0 %v752
  %907 = vmatprep.subr.mxu0 %v755
  %908 = vmatpush1.msra.mxu0 %v754
  %909 = vmatprep.subr.mxu0 %v757
  %910 = vmatpush1.msra.mxu0 %v756
  %911 = vmatprep.subr.mxu0 %v759
  %912 = vmatpush1.msra.mxu0 %v758
  %913 = vmatprep.subr.mxu0 %v761
  %914 = vmatpush1.msra.mxu0 %v760
  %915 = vmatprep.subr.mxu0 %v763
  %916 = vmatpush1.msra.mxu0 %v762
  %917 = vmatprep.subr.mxu0 %v765
  %918 = vmatpush1.msra.mxu0 %v764
  %919 = vmatprep.subr.mxu0 %v767
  %920 = vmatpush1.msra.mxu0 %v766
  %921 = vmatprep.subr.mxu0 %v769
  %922 = vmatpush1.msra.mxu0 %v768
  %923 = vmatprep.subr.mxu0 %v771
  %924 = vmatpush1.msra.mxu0 %v770
  %925 = vmatprep.subr.mxu0 %v773
  %926 = vmatpush1.msra.mxu0 %v772
  %927 = vmatprep.mubr.f32.mxu0 %v641
  %928 = vmatmul.mubr.f32.gmra.mrb[0].mxu0 %v640
  %v929 = vpop.f32.mrb[0].mxu0
  %v930 = vadd.f32 %v853, %v929
  %v931 = vpop.f32.mrb[0].mxu0
  %v932 = vadd.f32 %v855, %v931
  %933 = vmatprep.mubr.f32.mxu0 %v645
  %934 = vmatmul.mubr.f32.gmra.mrb[0].mxu0 %v644
  %v935 = vpop.f32.mrb[0].mxu0
  %v936 = vadd.f32 %v859, %v935
  %v937 = vpop.f32.mrb[0].mxu0
  %v938 = vadd.f32 %v861, %v937
  %939 = vdwg.mxu0
  %v940 = vmax.f32 %v930, 0.0
  %v941 = vmax.f32 %v932, 0.0
  %v942 = vmax.f32 %v936, 0.0
  %v943 = vmax.f32 %v938, 0.0
  %v944 = vld [vmem:[%s11] sm:$0x3]
  %v946 = vlaneseq
  %v947 = vshrl.u32 %v946, 7
  %v948 = vsub.s32 0, %v947
  %v949 = vrot.slane %v944, %v948
  %v950 = vlaneseq
  %v951 = vshrl.u32 %v950, 7
  %v952 = vsub.s32 1, %v951
  %v953 = vrot.slane %v944, %v952
  %v956 = vmul.f32 %v940, %v949
  %v957 = vmul.f32 %v941, %v953
  %v958 = vmul.f32 %v942, %v949
  %v959 = vmul.f32 %v943, %v953
  %v960 = vadd.f32 %v956, %v957
  %961 = vadd.xlane.f32.xlu0 %v960
  %v962 = vpop.xlane.xlu0 %961
  %v963 = vsel %vm477, %v958, 0.0
  %v964 = vsel %vm477, %v959, 0.0
  %v965 = vadd.f32 %v963, %v964
  %966 = vadd.xlane.f32.xlu0 %v965
  %v967 = vpop.xlane.xlu0 %966
  %v968 = vld [vmem:[#allocation3] sm:$0x1]
  %v970 = vlaneseq
  %v971 = vshrl.u32 %v970, 7
  %v972 = vsub.s32 0, %v971
  %v973 = vrot.slane %v968, %v972
  %v975 = vadd.f32 %v962, %v973
  %v976 = vadd.f32 %v967, %v973
  %v977 = vld [vmem:[%s13] sm:$0xf]
  %v979 = vlaneseq
  %v980 = vshrl.u32 %v979, 7
  %v981 = vsub.s32 0, %v980
  %v982 = vrot.slane %v977, %v981
  %v983 = vlaneseq
  %v984 = vshrl.u32 %v983, 7
  %v985 = vsub.s32 1, %v984
  %v986 = vrot.slane %v977, %v985
  %v987 = vlaneseq
  %v988 = vshrl.u32 %v987, 7
  %v989 = vsub.s32 2, %v988
  %v990 = vrot.slane %v977, %v989
  %v991 = vlaneseq
  %v992 = vshrl.u32 %v991, 7
  %v993 = vsub.s32 3, %v992
  %v994 = vrot.slane %v977, %v993
  %v999 = vmul.f32 %v549, %v982
  %v1000 = vmul.f32 %v549, %v986
  %v1001 = vmul.f32 %v549, %v990
  %v1002 = vmul.f32 %v549, %v994
  %v1003 = vmul.f32 %v554, %v982
  %v1004 = vmul.f32 %v554, %v986
  %v1005 = vmul.f32 %v554, %v990
  %v1006 = vmul.f32 %v554, %v994
  %v1007 = vld [vmem:[%s14] sm:$0xf]
  %v1009 = vlaneseq
  %v1010 = vshrl.u32 %v1009, 7
  %v1011 = vsub.s32 0, %v1010
  %v1012 = vrot.slane %v1007, %v1011
  %v1013 = vlaneseq
  %v1014 = vshrl.u32 %v1013, 7
  %v1015 = vsub.s32 1, %v1014
  %v1016 = vrot.slane %v1007, %v1015
  %v1017 = vlaneseq
  %v1018 = vshrl.u32 %v1017, 7
  %v1019 = vsub.s32 2, %v1018
  %v1020 = vrot.slane %v1007, %v1019
  %v1021 = vlaneseq
  %v1022 = vshrl.u32 %v1021, 7
  %v1023 = vsub.s32 3, %v1022
  %v1024 = vrot.slane %v1007, %v1023
  %v1029 = vadd.f32 %v999, %v1012
  %v1030 = vadd.f32 %v1000, %v1016
  %v1031 = vadd.f32 %v1001, %v1020
  %v1032 = vadd.f32 %v1002, %v1024
  %v1033 = vadd.f32 %v1003, %v1012
  %v1034 = vadd.f32 %v1004, %v1016
  %v1035 = vadd.f32 %v1005, %v1020
  %v1036 = vadd.f32 %v1006, %v1024
  %v1037 = vmax.f32 %v1029, 0.0
  %v1038 = vmax.f32 %v1030, 0.0
  %v1039 = vmax.f32 %v1031, 0.0
  %v1040 = vmax.f32 %v1032, 0.0
  %v1041 = vmax.f32 %v1033, 0.0
  %v1042 = vmax.f32 %v1034, 0.0
  %v1043 = vmax.f32 %v1035, 0.0
  %v1044 = vmax.f32 %v1036, 0.0
  %v1045 = vld [vmem:[%s15] sm:$0xff]
  %v1046 = vld [vmem:[%s15 + $0x8] sm:$0xff]
  %v1047 = vld [vmem:[%s15 + $0x10] sm:$0xff]
  %v1048 = vld [vmem:[%s15 + $0x18] sm:$0xff]
  %v1049 = vld [vmem:[%s15 + $0x20] sm:$0xff]
  %v1050 = vld [vmem:[%s15 + $0x28] sm:$0xff]
  %v1051 = vld [vmem:[%s15 + $0x30] sm:$0xff]
  %v1052 = vld [vmem:[%s15 + $0x38] sm:$0xff]
  %v1053 = vld [vmem:[%s15 + $0x40] sm:$0xff]
  %v1054 = vld [vmem:[%s15 + $0x48] sm:$0xff]
  %v1055 = vld [vmem:[%s15 + $0x50] sm:$0xff]
  %v1056 = vld [vmem:[%s15 + $0x58] sm:$0xff]
  %v1057 = vld [vmem:[%s15 + $0x60] sm:$0xff]
  %v1058 = vld [vmem:[%s15 + $0x68] sm:$0xff]
  %v1059 = vld [vmem:[%s15 + $0x70] sm:$0xff]
  %v1060 = vld [vmem:[%s15 + $0x78] sm:$0xff]
  %v1061 = vld [vmem:[%s15 + $0x80] sm:$0xff]
  %v1062 = vld [vmem:[%s15 + $0x88] sm:$0xff]
  %v1063 = vld [vmem:[%s15 + $0x90] sm:$0xff]
  %v1064 = vld [vmem:[%s15 + $0x98] sm:$0xff]
  %v1065 = vld [vmem:[%s15 + $0xa0] sm:$0xff]
  %v1066 = vld [vmem:[%s15 + $0xa8] sm:$0xff]
  %v1067 = vld [vmem:[%s15 + $0xb0] sm:$0xff]
  %v1068 = vld [vmem:[%s15 + $0xb8] sm:$0xff]
  %v1069 = vld [vmem:[%s15 + $0xc0] sm:$0xff]
  %v1070 = vld [vmem:[%s15 + $0xc8] sm:$0xff]
  %v1071 = vld [vmem:[%s15 + $0xd0] sm:$0xff]
  %v1072 = vld [vmem:[%s15 + $0xd8] sm:$0xff]
  %v1073 = vld [vmem:[%s15 + $0xe0] sm:$0xff]
  %v1074 = vld [vmem:[%s15 + $0xe8] sm:$0xff]
  %v1075 = vld [vmem:[%s15 + $0xf0] sm:$0xff]
  %v1076 = vld [vmem:[%s15 + $0xf8] sm:$0xff]
  %v1077 = vld [vmem:[%s15 + $0x100] sm:$0xff]
  %v1078 = vld [vmem:[%s15 + $0x108] sm:$0xff]
  %v1079 = vld [vmem:[%s15 + $0x110] sm:$0xff]
  %v1080 = vld [vmem:[%s15 + $0x118] sm:$0xff]
  %v1081 = vld [vmem:[%s15 + $0x120] sm:$0xff]
  %v1082 = vld [vmem:[%s15 + $0x128] sm:$0xff]
  %v1083 = vld [vmem:[%s15 + $0x130] sm:$0xff]
  %v1084 = vld [vmem:[%s15 + $0x138] sm:$0xff]
  %v1085 = vld [vmem:[%s15 + $0x140] sm:$0xff]
  %v1086 = vld [vmem:[%s15 + $0x148] sm:$0xff]
  %v1087 = vld [vmem:[%s15 + $0x150] sm:$0xff]
  %v1088 = vld [vmem:[%s15 + $0x158] sm:$0xff]
  %v1089 = vld [vmem:[%s15 + $0x160] sm:$0xff]
  %v1090 = vld [vmem:[%s15 + $0x168] sm:$0xff]
  %v1091 = vld [vmem:[%s15 + $0x170] sm:$0xff]
  %v1092 = vld [vmem:[%s15 + $0x178] sm:$0xff]
  %v1093 = vld [vmem:[%s15 + $0x180] sm:$0xff]
  %v1094 = vld [vmem:[%s15 + $0x188] sm:$0xff]
  %v1095 = vld [vmem:[%s15 + $0x190] sm:$0xff]
  %v1096 = vld [vmem:[%s15 + $0x198] sm:$0xff]
  %v1097 = vld [vmem:[%s15 + $0x1a0] sm:$0xff]
  %v1098 = vld [vmem:[%s15 + $0x1a8] sm:$0xff]
  %v1099 = vld [vmem:[%s15 + $0x1b0] sm:$0xff]
  %v1100 = vld [vmem:[%s15 + $0x1b8] sm:$0xff]
  %v1101 = vld [vmem:[%s15 + $0x1c0] sm:$0xff]
  %v1102 = vld [vmem:[%s15 + $0x1c8] sm:$0xff]
  %v1103 = vld [vmem:[%s15 + $0x1d0] sm:$0xff]
  %v1104 = vld [vmem:[%s15 + $0x1d8] sm:$0xff]
  %v1105 = vld [vmem:[%s15 + $0x1e0] sm:$0xff]
  %v1106 = vld [vmem:[%s15 + $0x1e8] sm:$0xff]
  %v1107 = vld [vmem:[%s15 + $0x1f0] sm:$0xff]
  %v1108 = vld [vmem:[%s15 + $0x1f8] sm:$0xff]
  %v1109 = vld [vmem:[%s15 + $0x200] sm:$0xff]
  %v1110 = vld [vmem:[%s15 + $0x208] sm:$0xff]
  %v1111 = vld [vmem:[%s15 + $0x210] sm:$0xff]
  %v1112 = vld [vmem:[%s15 + $0x218] sm:$0xff]
  %v1113 = vld [vmem:[%s15 + $0x220] sm:$0xff]
  %v1114 = vld [vmem:[%s15 + $0x228] sm:$0xff]
  %v1115 = vld [vmem:[%s15 + $0x230] sm:$0xff]
  %v1116 = vld [vmem:[%s15 + $0x238] sm:$0xff]
  %v1117 = vld [vmem:[%s15 + $0x240] sm:$0xff]
  %v1118 = vld [vmem:[%s15 + $0x248] sm:$0xff]
  %v1119 = vld [vmem:[%s15 + $0x250] sm:$0xff]
  %v1120 = vld [vmem:[%s15 + $0x258] sm:$0xff]
  %v1121 = vld [vmem:[%s15 + $0x260] sm:$0xff]
  %v1122 = vld [vmem:[%s15 + $0x268] sm:$0xff]
  %v1123 = vld [vmem:[%s15 + $0x270] sm:$0xff]
  %v1124 = vld [vmem:[%s15 + $0x278] sm:$0xff]
  %v1125 = vld [vmem:[%s15 + $0x280] sm:$0xff]
  %v1126 = vld [vmem:[%s15 + $0x288] sm:$0xff]
  %v1127 = vld [vmem:[%s15 + $0x290] sm:$0xff]
  %v1128 = vld [vmem:[%s15 + $0x298] sm:$0xff]
  %v1129 = vld [vmem:[%s15 + $0x2a0] sm:$0xff]
  %v1130 = vld [vmem:[%s15 + $0x2a8] sm:$0xff]
  %v1131 = vld [vmem:[%s15 + $0x2b0] sm:$0xff]
  %v1132 = vld [vmem:[%s15 + $0x2b8] sm:$0xff]
  %v1133 = vld [vmem:[%s15 + $0x2c0] sm:$0xff]
  %v1134 = vld [vmem:[%s15 + $0x2c8] sm:$0xff]
  %v1135 = vld [vmem:[%s15 + $0x2d0] sm:$0xff]
  %v1136 = vld [vmem:[%s15 + $0x2d8] sm:$0xff]
  %v1137 = vld [vmem:[%s15 + $0x2e0] sm:$0xff]
  %v1138 = vld [vmem:[%s15 + $0x2e8] sm:$0xff]
  %v1139 = vld [vmem:[%s15 + $0x2f0] sm:$0xff]
  %v1140 = vld [vmem:[%s15 + $0x2f8] sm:$0xff]
  %v1141 = vld [vmem:[%s15 + $0x300] sm:$0xff]
  %v1142 = vld [vmem:[%s15 + $0x308] sm:$0xff]
  %v1143 = vld [vmem:[%s15 + $0x310] sm:$0xff]
  %v1144 = vld [vmem:[%s15 + $0x318] sm:$0xff]
  %v1145 = vld [vmem:[%s15 + $0x320] sm:$0xff]
  %v1146 = vld [vmem:[%s15 + $0x328] sm:$0xff]
  %v1147 = vld [vmem:[%s15 + $0x330] sm:$0xff]
  %v1148 = vld [vmem:[%s15 + $0x338] sm:$0xff]
  %v1149 = vld [vmem:[%s15 + $0x340] sm:$0xff]
  %v1150 = vld [vmem:[%s15 + $0x348] sm:$0xff]
  %v1151 = vld [vmem:[%s15 + $0x350] sm:$0xff]
  %v1152 = vld [vmem:[%s15 + $0x358] sm:$0xff]
  %v1153 = vld [vmem:[%s15 + $0x360] sm:$0xff]
  %v1154 = vld [vmem:[%s15 + $0x368] sm:$0xff]
  %v1155 = vld [vmem:[%s15 + $0x370] sm:$0xff]
  %v1156 = vld [vmem:[%s15 + $0x378] sm:$0xff]
  %v1157 = vld [vmem:[%s15 + $0x380] sm:$0xff]
  %v1158 = vld [vmem:[%s15 + $0x388] sm:$0xff]
  %v1159 = vld [vmem:[%s15 + $0x390] sm:$0xff]
  %v1160 = vld [vmem:[%s15 + $0x398] sm:$0xff]
  %v1161 = vld [vmem:[%s15 + $0x3a0] sm:$0xff]
  %v1162 = vld [vmem:[%s15 + $0x3a8] sm:$0xff]
  %v1163 = vld [vmem:[%s15 + $0x3b0] sm:$0xff]
  %v1164 = vld [vmem:[%s15 + $0x3b8] sm:$0xff]
  %v1165 = vld [vmem:[%s15 + $0x3c0] sm:$0xff]
  %v1166 = vld [vmem:[%s15 + $0x3c8] sm:$0xff]
  %v1167 = vld [vmem:[%s15 + $0x3d0] sm:$0xff]
  %v1168 = vld [vmem:[%s15 + $0x3d8] sm:$0xff]
  %v1169 = vld [vmem:[%s15 + $0x3e0] sm:$0xff]
  %v1170 = vld [vmem:[%s15 + $0x3e8] sm:$0xff]
  %v1171 = vld [vmem:[%s15 + $0x3f0] sm:$0xff]
  %v1172 = vld [vmem:[%s15 + $0x3f8] sm:$0xff]
  %v1173 = vld [vmem:[%s16] sm:$0x3]
  %v1175 = vlaneseq
  %v1176 = vshrl.u32 %v1175, 7
  %v1177 = vsub.s32 0, %v1176
  %v1178 = vrot.slane %v1173, %v1177
  %v1179 = vlaneseq
  %v1180 = vshrl.u32 %v1179, 7
  %v1181 = vsub.s32 1, %v1180
  %v1182 = vrot.slane %v1173, %v1181
  %1185 = vmatprep.subr.mxu0 %v1046
  %1186 = vmatpush1.msra.mxu0 %v1045
  %1187 = vmatprep.subr.mxu0 %v1048
  %1188 = vmatpush1.msra.mxu0 %v1047
  %1189 = vmatprep.subr.mxu0 %v1050
  %1190 = vmatpush1.msra.mxu0 %v1049
  %1191 = vmatprep.subr.mxu0 %v1052
  %1192 = vmatpush1.msra.mxu0 %v1051
  %1193 = vmatprep.subr.mxu0 %v1054
  %1194 = vmatpush1.msra.mxu0 %v1053
  %1195 = vmatprep.subr.mxu0 %v1056
  %1196 = vmatpush1.msra.mxu0 %v1055
  %1197 = vmatprep.subr.mxu0 %v1058
  %1198 = vmatpush1.msra.mxu0 %v1057
  %1199 = vmatprep.subr.mxu0 %v1060
  %1200 = vmatpush1.msra.mxu0 %v1059
  %1201 = vmatprep.subr.mxu0 %v1062
  %1202 = vmatpush1.msra.mxu0 %v1061
  %1203 = vmatprep.subr.mxu0 %v1064
  %1204 = vmatpush1.msra.mxu0 %v1063
  %1205 = vmatprep.subr.mxu0 %v1066
  %1206 = vmatpush1.msra.mxu0 %v1065
  %1207 = vmatprep.subr.mxu0 %v1068
  %1208 = vmatpush1.msra.mxu0 %v1067
  %1209 = vmatprep.subr.mxu0 %v1070
  %1210 = vmatpush1.msra.mxu0 %v1069
  %1211 = vmatprep.subr.mxu0 %v1072
  %1212 = vmatpush1.msra.mxu0 %v1071
  %1213 = vmatprep.subr.mxu0 %v1074
  %1214 = vmatpush1.msra.mxu0 %v1073
  %1215 = vmatprep.subr.mxu0 %v1076
  %1216 = vmatpush1.msra.mxu0 %v1075
  %1217 = vmatprep.subr.mxu0 %v1078
  %1218 = vmatpush1.msra.mxu0 %v1077
  %1219 = vmatprep.subr.mxu0 %v1080
  %1220 = vmatpush1.msra.mxu0 %v1079
  %1221 = vmatprep.subr.mxu0 %v1082
  %1222 = vmatpush1.msra.mxu0 %v1081
  %1223 = vmatprep.subr.mxu0 %v1084
  %1224 = vmatpush1.msra.mxu0 %v1083
  %1225 = vmatprep.subr.mxu0 %v1086
  %1226 = vmatpush1.msra.mxu0 %v1085
  %1227 = vmatprep.subr.mxu0 %v1088
  %1228 = vmatpush1.msra.mxu0 %v1087
  %1229 = vmatprep.subr.mxu0 %v1090
  %1230 = vmatpush1.msra.mxu0 %v1089
  %1231 = vmatprep.subr.mxu0 %v1092
  %1232 = vmatpush1.msra.mxu0 %v1091
  %1233 = vmatprep.subr.mxu0 %v1094
  %1234 = vmatpush1.msra.mxu0 %v1093
  %1235 = vmatprep.subr.mxu0 %v1096
  %1236 = vmatpush1.msra.mxu0 %v1095
  %1237 = vmatprep.subr.mxu0 %v1098
  %1238 = vmatpush1.msra.mxu0 %v1097
  %1239 = vmatprep.subr.mxu0 %v1100
  %1240 = vmatpush1.msra.mxu0 %v1099
  %1241 = vmatprep.subr.mxu0 %v1102
  %1242 = vmatpush1.msra.mxu0 %v1101
  %1243 = vmatprep.subr.mxu0 %v1104
  %1244 = vmatpush1.msra.mxu0 %v1103
  %1245 = vmatprep.subr.mxu0 %v1106
  %1246 = vmatpush1.msra.mxu0 %v1105
  %1247 = vmatprep.subr.mxu0 %v1108
  %1248 = vmatpush1.msra.mxu0 %v1107
  %1249 = vmatprep.mubr.f32.mxu0 %v1038
  %1250 = vmatmul.mubr.f32.gmra.mrb[0].mxu0 %v1037
  %v1251 = vpop.f32.mrb[0].mxu0
  %v1252 = vadd.f32 %v1178, %v1251
  %v1253 = vpop.f32.mrb[0].mxu0
  %v1254 = vadd.f32 %v1182, %v1253
  %1255 = vmatprep.mubr.f32.mxu0 %v1042
  %1256 = vmatmul.mubr.f32.gmra.mrb[0].mxu0 %v1041
  %v1257 = vpop.f32.mrb[0].mxu0
  %v1258 = vpop.f32.mrb[0].mxu0
  %1259 = vdwg.mxu0
  %1260 = vmatprep.subr.mxu0 %v1110
  %1261 = vmatpush1.msra.mxu0 %v1109
  %1262 = vmatprep.subr.mxu0 %v1112
  %1263 = vmatpush1.msra.mxu0 %v1111
  %1264 = vmatprep.subr.mxu0 %v1114
  %1265 = vmatpush1.msra.mxu0 %v1113
  %1266 = vmatprep.subr.mxu0 %v1116
  %1267 = vmatpush1.msra.mxu0 %v1115
  %1268 = vmatprep.subr.mxu0 %v1118
  %1269 = vmatpush1.msra.mxu0 %v1117
  %1270 = vmatprep.subr.mxu0 %v1120
  %1271 = vmatpush1.msra.mxu0 %v1119
  %1272 = vmatprep.subr.mxu0 %v1122
  %1273 = vmatpush1.msra.mxu0 %v1121
  %1274 = vmatprep.subr.mxu0 %v1124
  %1275 = vmatpush1.msra.mxu0 %v1123
  %1276 = vmatprep.subr.mxu0 %v1126
  %1277 = vmatpush1.msra.mxu0 %v1125
  %1278 = vmatprep.subr.mxu0 %v1128
  %1279 = vmatpush1.msra.mxu0 %v1127
  %1280 = vmatprep.subr.mxu0 %v1130
  %1281 = vmatpush1.msra.mxu0 %v1129
  %1282 = vmatprep.subr.mxu0 %v1132
  %1283 = vmatpush1.msra.mxu0 %v1131
  %1284 = vmatprep.subr.mxu0 %v1134
  %1285 = vmatpush1.msra.mxu0 %v1133
  %1286 = vmatprep.subr.mxu0 %v1136
  %1287 = vmatpush1.msra.mxu0 %v1135
  %1288 = vmatprep.subr.mxu0 %v1138
  %1289 = vmatpush1.msra.mxu0 %v1137
  %1290 = vmatprep.subr.mxu0 %v1140
  %1291 = vmatpush1.msra.mxu0 %v1139
  %1292 = vmatprep.subr.mxu0 %v1142
  %1293 = vmatpush1.msra.mxu0 %v1141
  %1294 = vmatprep.subr.mxu0 %v1144
  %1295 = vmatpush1.msra.mxu0 %v1143
  %1296 = vmatprep.subr.mxu0 %v1146
  %1297 = vmatpush1.msra.mxu0 %v1145
  %1298 = vmatprep.subr.mxu0 %v1148
  %1299 = vmatpush1.msra.mxu0 %v1147
  %1300 = vmatprep.subr.mxu0 %v1150
  %1301 = vmatpush1.msra.mxu0 %v1149
  %1302 = vmatprep.subr.mxu0 %v1152
  %1303 = vmatpush1.msra.mxu0 %v1151
  %1304 = vmatprep.subr.mxu0 %v1154
  %1305 = vmatpush1.msra.mxu0 %v1153
  %1306 = vmatprep.subr.mxu0 %v1156
  %1307 = vmatpush1.msra.mxu0 %v1155
  %1308 = vmatprep.subr.mxu0 %v1158
  %1309 = vmatpush1.msra.mxu0 %v1157
  %1310 = vmatprep.subr.mxu0 %v1160
  %1311 = vmatpush1.msra.mxu0 %v1159
  %1312 = vmatprep.subr.mxu0 %v1162
  %1313 = vmatpush1.msra.mxu0 %v1161
  %1314 = vmatprep.subr.mxu0 %v1164
  %1315 = vmatpush1.msra.mxu0 %v1163
  %1316 = vmatprep.subr.mxu0 %v1166
  %1317 = vmatpush1.msra.mxu0 %v1165
  %1318 = vmatprep.subr.mxu0 %v1168
  %1319 = vmatpush1.msra.mxu0 %v1167
  %1320 = vmatprep.subr.mxu0 %v1170
  %1321 = vmatpush1.msra.mxu0 %v1169
  %1322 = vmatprep.subr.mxu0 %v1172
  %1323 = vmatpush1.msra.mxu0 %v1171
  %1324 = vmatprep.mubr.f32.mxu0 %v1040
  %1325 = vmatmul.mubr.f32.gmra.mrb[0].mxu0 %v1039
  %v1326 = vpop.f32.mrb[0].mxu0
  %v1327 = vadd.f32 %v1252, %v1326
  %v1328 = vpop.f32.mrb[0].mxu0
  %v1329 = vadd.f32 %v1254, %v1328
  %1330 = vmatprep.mubr.f32.mxu0 %v1044
  %1331 = vmatmul.mubr.f32.gmra.mrb[0].mxu0 %v1043
  %v1332 = vpop.f32.mrb[0].mxu0
  %v1333 = vpop.f32.mrb[0].mxu0
  %1334 = vdwg.mxu0
  %v1335 = vmax.f32 %v1327, 0.0
  %v1336 = vmax.f32 %v1329, 0.0
  %v1337 = vld [vmem:[%s17] sm:$0x3]
  %v1339 = vlaneseq
  %v1340 = vshrl.u32 %v1339, 7
  %v1341 = vsub.s32 0, %v1340
  %v1342 = vrot.slane %v1337, %v1341
  %v1343 = vlaneseq
  %v1344 = vshrl.u32 %v1343, 7
  %v1345 = vsub.s32 1, %v1344
  %v1346 = vrot.slane %v1337, %v1345
  %v1349 = vmul.f32 %v1335, %v1342
  %v1350 = vmul.f32 %v1336, %v1346
  %v1351 = vadd.f32 %v1349, %v1350
  %1352 = vadd.xlane.f32.xlu0 %v1351
  %v1353 = vpop.xlane.xlu0 %1352
  %v1354 = vld [vmem:[#allocation4] sm:$0x1]
  %v1356 = vlaneseq
  %v1357 = vshrl.u32 %v1356, 7
  %v1358 = vsub.s32 0, %v1357
  %v1359 = vrot.slane %v1354, %v1358
  %v1361 = vadd.f32 %v1353, %v1359
  %v1362 = vsub.f32 0.0, %v80
  %v1363 = vmul.f32 %v1362, 1.442695
  %v1364 = vpow.pop %v1363
  %v1365 = vadd.f32 %v1364, 1.0
  %v1366 = vrcp.pop %v1365
  %v1367 = vmax.f32 %v80, 0.0
  %v1368 = vand.u32 2147483647, %v80
  %v1369 = vsub.f32 0.0, %v1368
  %v1370 = vmul.f32 %v1369, 1.442695
  %v1371 = vpow.pop %v1370
  %v1372 = vadd.f32 %v1371, 1.0
  %v1373 = vlog2.pop %v1372
  %v1374 = vmul.f32 %v1373, 0.6931472
  %v1375 = vadd.f32 %v1367, %v1374
  %v1376 = vsub.f32 0.0, %v975
  %v1377 = vmul.f32 %v1376, 1.442695
  %v1378 = vpow.pop %v1377
  %v1379 = vadd.f32 %v1378, 1.0
  %v1380 = vrcp.pop %v1379
  %v1381 = vsub.f32 0.0, %v1361
  %v1382 = vmul.f32 %v1381, 1.442695
  %v1383 = vpow.pop %v1382
  %v1384 = vadd.f32 %v1383, 1.0
  %v1385 = vrcp.pop %v1384
  %v1386 = vsub.f32 0.0, %v976
  %v1387 = vmul.f32 %v1386, 1.442695
  %v1388 = vpow.pop %v1387
  %v1389 = vadd.f32 %v1388, 1.0
  %v1390 = vrcp.pop %v1389
  %v1391 = vsub.f32 1.0, %v1366
  %1393 = vrot.lane.b32.xlu0 %v1380, 2
  %v1394 = vpop.permute.xlu0 %1393
  %v1396 = vmul.f32 %v1391, %v1394
  %1398 = vrot.lane.b32.xlu0 %v1385, 2
  %v1399 = vpop.permute.xlu0 %1398
  %v1401 = vmul.f32 %v1366, %v1399
  %v1402 = vadd.f32 %v1396, %v1401
  %v1403 = vsub.f32 0.0, %v1402
  %v1404 = vmul.f32 %v1403, 1.442695
  %v1405 = vpow.pop %v1404
  %v1406 = vadd.f32 %v1405, 1.0
  %v1407 = vrcp.pop %v1406
  %v1408 = vlaneseq
  %v1409 = vshrl.u32 %v1408, 7
  %v1410 = vsub.s32 0, %v1409
  %v1411 = vrot.slane %v1390, %v1410
  %1413 = vrot.lane.b32.xlu0 %v1411, 2
  %v1414 = vpop.permute.xlu0 %1413
  %v1416 = vmul.f32 %v1391, %v1414
  %v1417 = vadd.f32 %v1416, %v1401
  %v1418 = vsub.f32 0.0, %v1417
  %v1419 = vmul.f32 %v1418, 1.442695
  %v1420 = vpow.pop %v1419
  %v1421 = vadd.f32 %v1420, 1.0
  %v1422 = vrcp.pop %v1421
  %1424 = vrot.lane.b32.xlu0 %v1422, 1
  %v1425 = vpop.permute.xlu0 %1424
  %v1427 = vmul.f32 %v1366, %v1425
  %1429 = vrot.lane.b32.xlu0 %v1427, 127
  %v1430 = vpop.permute.xlu0 %1429
  %v1432 = vsub.f32 %v1407, %v1430
  %v1433 = vsub.f32 0.0, %v1432
  %v1434 = vmul.f32 %v1433, 1.442695
  %v1435 = vpow.pop %v1434
  %v1436 = vadd.f32 %v1435, 1.0
  %v1437 = vrcp.pop %v1436
  %v1438 = vmul.f32 %v1375, 1.702
  %1440 = vrot.lane.b32.xlu0 %v1366, 125
  %v1441 = vpop.permute.xlu0 %1440
  %v1443 = vsub.f32 %v1437, %v1441
  %1445 = vrot.lane.b32.xlu0 %v1443, 2
  %v1446 = vpop.permute.xlu0 %1445
  %v1448 = vmul.f32 %v1438, %v1446
  %v1449 = vsub.f32 0.0, %v1448
  %v1450 = vmul.f32 %v1449, 1.442695
  %v1451 = vpow.pop %v1450
  %v1452 = vadd.f32 %v1451, 1.0
  %v1453 = vrcp.pop %v1452
  %1455 = vrot.lane.b32.xlu0 %v1453, 2
  %v1456 = vpop.permute.xlu0 %1455
  %v1458 = vmul.f32 %v1391, %v1456
  %v1459 = vadd.f32 %v1366, %v1458
  %1461 = vrot.lane.b32.xlu0 %v1459, 122
  %v1462 = vpop.permute.xlu0 %1461
  %vm1464 = vcmask 7168
  %1465 = vst.msk [vmem:[%s23] sm:$0xff] %vm1464, %v1462
  %v1466 = vld [vmem:[%s19] sm:$0xff]
  %v1467 = vld [vmem:[%s19 + $0x8] sm:$0xff]
  %v1468 = vld [vmem:[%s19 + $0x10] sm:$0xf]
  %1470 = vset.pattern.permute.xlu0 0
  %1471 = vperm.xlu0 %1470, %v975
  %v1472 = vpop.permute.xlu0 %1471
  %v1477 = vlaneseq
  %v1478 = vshrl.u32 %v1477, 7
  %v1479 = vsub.s32 0, %v1478
  %v1480 = vrot.slane %v1466, %v1479
  %v1481 = vlaneseq
  %v1482 = vshrl.u32 %v1481, 7
  %v1483 = vsub.s32 1, %v1482
  %v1484 = vrot.slane %v1466, %v1483
  %v1485 = vlaneseq
  %v1486 = vshrl.u32 %v1485, 7
  %v1487 = vsub.s32 2, %v1486
  %v1488 = vrot.slane %v1466, %v1487
  %v1489 = vlaneseq
  %v1490 = vshrl.u32 %v1489, 7
  %v1491 = vsub.s32 3, %v1490
  %v1492 = vrot.slane %v1466, %v1491
  %v1493 = vlaneseq
  %v1494 = vshrl.u32 %v1493, 7
  %v1495 = vsub.s32 4, %v1494
  %v1496 = vrot.slane %v1466, %v1495
  %v1497 = vlaneseq
  %v1498 = vshrl.u32 %v1497, 7
  %v1499 = vsub.s32 5, %v1498
  %v1500 = vrot.slane %v1466, %v1499
  %v1501 = vlaneseq
  %v1502 = vshrl.u32 %v1501, 7
  %v1503 = vsub.s32 6, %v1502
  %v1504 = vrot.slane %v1466, %v1503
  %v1505 = vlaneseq
  %v1506 = vshrl.u32 %v1505, 7
  %v1507 = vsub.s32 7, %v1506
  %v1508 = vrot.slane %v1466, %v1507
  %v1509 = vlaneseq
  %v1510 = vshrl.u32 %v1509, 7
  %v1511 = vsub.s32 0, %v1510
  %v1512 = vrot.slane %v1467, %v1511
  %v1513 = vlaneseq
  %v1514 = vshrl.u32 %v1513, 7
  %v1515 = vsub.s32 1, %v1514
  %v1516 = vrot.slane %v1467, %v1515
  %v1517 = vlaneseq
  %v1518 = vshrl.u32 %v1517, 7
  %v1519 = vsub.s32 2, %v1518
  %v1520 = vrot.slane %v1467, %v1519
  %v1521 = vlaneseq
  %v1522 = vshrl.u32 %v1521, 7
  %v1523 = vsub.s32 3, %v1522
  %v1524 = vrot.slane %v1467, %v1523
  %v1525 = vlaneseq
  %v1526 = vshrl.u32 %v1525, 7
  %v1527 = vsub.s32 4, %v1526
  %v1528 = vrot.slane %v1467, %v1527
  %v1529 = vlaneseq
  %v1530 = vshrl.u32 %v1529, 7
  %v1531 = vsub.s32 5, %v1530
  %v1532 = vrot.slane %v1467, %v1531
  %v1533 = vlaneseq
  %v1534 = vshrl.u32 %v1533, 7
  %v1535 = vsub.s32 6, %v1534
  %v1536 = vrot.slane %v1467, %v1535
  %v1537 = vlaneseq
  %v1538 = vshrl.u32 %v1537, 7
  %v1539 = vsub.s32 7, %v1538
  %v1540 = vrot.slane %v1467, %v1539
  %v1541 = vlaneseq
  %v1542 = vshrl.u32 %v1541, 7
  %v1543 = vsub.s32 0, %v1542
  %v1544 = vrot.slane %v1468, %v1543
  %v1545 = vlaneseq
  %v1546 = vshrl.u32 %v1545, 7
  %v1547 = vsub.s32 1, %v1546
  %v1548 = vrot.slane %v1468, %v1547
  %v1549 = vlaneseq
  %v1550 = vshrl.u32 %v1549, 7
  %v1551 = vsub.s32 2, %v1550
  %v1552 = vrot.slane %v1468, %v1551
  %v1553 = vlaneseq
  %v1554 = vshrl.u32 %v1553, 7
  %v1555 = vsub.s32 3, %v1554
  %v1556 = vrot.slane %v1468, %v1555
  %v1577 = vmul.f32 %v1472, %v1480
  %v1578 = vmul.f32 %v1472, %v1484
  %v1579 = vmul.f32 %v1472, %v1488
  %v1580 = vmul.f32 %v1472, %v1492
  %v1581 = vmul.f32 %v1472, %v1496
  %v1582 = vmul.f32 %v1472, %v1500
  %v1583 = vmul.f32 %v1472, %v1504
  %v1584 = vmul.f32 %v1472, %v1508
  %v1585 = vmul.f32 %v1472, %v1512
  %v1586 = vmul.f32 %v1472, %v1516
  %v1587 = vmul.f32 %v1472, %v1520
  %v1588 = vmul.f32 %v1472, %v1524
  %v1589 = vmul.f32 %v1472, %v1528
  %v1590 = vmul.f32 %v1472, %v1532
  %v1591 = vmul.f32 %v1472, %v1536
  %v1592 = vmul.f32 %v1472, %v1540
  %v1593 = vmul.f32 %v1472, %v1544
  %v1594 = vmul.f32 %v1472, %v1548
  %v1595 = vmul.f32 %v1472, %v1552
  %v1596 = vmul.f32 %v1472, %v1556
  %v1597 = vld [vmem:[%s20] sm:$0xff]
  %v1598 = vld [vmem:[%s20 + $0x8] sm:$0xff]
  %v1599 = vld [vmem:[%s20 + $0x10] sm:$0xf]
  %v1603 = vlaneseq
  %v1604 = vshrl.u32 %v1603, 7
  %v1605 = vsub.s32 0, %v1604
  %v1606 = vrot.slane %v1597, %v1605
  %v1607 = vlaneseq
  %v1608 = vshrl.u32 %v1607, 7
  %v1609 = vsub.s32 1, %v1608
  %v1610 = vrot.slane %v1597, %v1609
  %v1611 = vlaneseq
  %v1612 = vshrl.u32 %v1611, 7
  %v1613 = vsub.s32 2, %v1612
  %v1614 = vrot.slane %v1597, %v1613
  %v1615 = vlaneseq
  %v1616 = vshrl.u32 %v1615, 7
  %v1617 = vsub.s32 3, %v1616
  %v1618 = vrot.slane %v1597, %v1617
  %v1619 = vlaneseq
  %v1620 = vshrl.u32 %v1619, 7
  %v1621 = vsub.s32 4, %v1620
  %v1622 = vrot.slane %v1597, %v1621
  %v1623 = vlaneseq
  %v1624 = vshrl.u32 %v1623, 7
  %v1625 = vsub.s32 5, %v1624
  %v1626 = vrot.slane %v1597, %v1625
  %v1627 = vlaneseq
  %v1628 = vshrl.u32 %v1627, 7
  %v1629 = vsub.s32 6, %v1628
  %v1630 = vrot.slane %v1597, %v1629
  %v1631 = vlaneseq
  %v1632 = vshrl.u32 %v1631, 7
  %v1633 = vsub.s32 7, %v1632
  %v1634 = vrot.slane %v1597, %v1633
  %v1635 = vlaneseq
  %v1636 = vshrl.u32 %v1635, 7
  %v1637 = vsub.s32 0, %v1636
  %v1638 = vrot.slane %v1598, %v1637
  %v1639 = vlaneseq
  %v1640 = vshrl.u32 %v1639, 7
  %v1641 = vsub.s32 1, %v1640
  %v1642 = vrot.slane %v1598, %v1641
  %v1643 = vlaneseq
  %v1644 = vshrl.u32 %v1643, 7
  %v1645 = vsub.s32 2, %v1644
  %v1646 = vrot.slane %v1598, %v1645
  %v1647 = vlaneseq
  %v1648 = vshrl.u32 %v1647, 7
  %v1649 = vsub.s32 3, %v1648
  %v1650 = vrot.slane %v1598, %v1649
  %v1651 = vlaneseq
  %v1652 = vshrl.u32 %v1651, 7
  %v1653 = vsub.s32 4, %v1652
  %v1654 = vrot.slane %v1598, %v1653
  %v1655 = vlaneseq
  %v1656 = vshrl.u32 %v1655, 7
  %v1657 = vsub.s32 5, %v1656
  %v1658 = vrot.slane %v1598, %v1657
  %v1659 = vlaneseq
  %v1660 = vshrl.u32 %v1659, 7
  %v1661 = vsub.s32 6, %v1660
  %v1662 = vrot.slane %v1598, %v1661
  %v1663 = vlaneseq
  %v1664 = vshrl.u32 %v1663, 7
  %v1665 = vsub.s32 7, %v1664
  %v1666 = vrot.slane %v1598, %v1665
  %v1667 = vlaneseq
  %v1668 = vshrl.u32 %v1667, 7
  %v1669 = vsub.s32 0, %v1668
  %v1670 = vrot.slane %v1599, %v1669
  %v1671 = vlaneseq
  %v1672 = vshrl.u32 %v1671, 7
  %v1673 = vsub.s32 1, %v1672
  %v1674 = vrot.slane %v1599, %v1673
  %v1675 = vlaneseq
  %v1676 = vshrl.u32 %v1675, 7
  %v1677 = vsub.s32 2, %v1676
  %v1678 = vrot.slane %v1599, %v1677
  %v1679 = vlaneseq
  %v1680 = vshrl.u32 %v1679, 7
  %v1681 = vsub.s32 3, %v1680
  %v1682 = vrot.slane %v1599, %v1681
  %v1703 = vadd.f32 %v1577, %v1606
  %v1704 = vadd.f32 %v1578, %v1610
  %v1705 = vadd.f32 %v1579, %v1614
  %v1706 = vadd.f32 %v1580, %v1618
  %v1707 = vadd.f32 %v1581, %v1622
  %v1708 = vadd.f32 %v1582, %v1626
  %v1709 = vadd.f32 %v1583, %v1630
  %v1710 = vadd.f32 %v1584, %v1634
  %v1711 = vadd.f32 %v1585, %v1638
  %v1712 = vadd.f32 %v1586, %v1642
  %v1713 = vadd.f32 %v1587, %v1646
  %v1714 = vadd.f32 %v1588, %v1650
  %v1715 = vadd.f32 %v1589, %v1654
  %v1716 = vadd.f32 %v1590, %v1658
  %v1717 = vadd.f32 %v1591, %v1662
  %v1718 = vadd.f32 %v1592, %v1666
  %v1719 = vadd.f32 %v1593, %v1670
  %v1720 = vadd.f32 %v1594, %v1674
  %v1721 = vadd.f32 %v1595, %v1678
  %v1722 = vadd.f32 %v1596, %v1682
  %v1723 = vmax.f32 %v1703, 0.0
  %v1724 = vmax.f32 %v1704, 0.0
  %v1725 = vmax.f32 %v1705, 0.0
  %v1726 = vmax.f32 %v1706, 0.0
  %v1727 = vmax.f32 %v1707, 0.0
  %v1728 = vmax.f32 %v1708, 0.0
  %v1729 = vmax.f32 %v1709, 0.0
  %v1730 = vmax.f32 %v1710, 0.0
  %v1731 = vmax.f32 %v1711, 0.0
  %v1732 = vmax.f32 %v1712, 0.0
  %v1733 = vmax.f32 %v1713, 0.0
  %v1734 = vmax.f32 %v1714, 0.0
  %v1735 = vmax.f32 %v1715, 0.0
  %v1736 = vmax.f32 %v1716, 0.0
  %v1737 = vmax.f32 %v1717, 0.0
  %v1738 = vmax.f32 %v1718, 0.0
  %v1739 = vmax.f32 %v1719, 0.0
  %v1740 = vmax.f32 %v1720, 0.0
  %v1741 = vmax.f32 %v1721, 0.0
  %v1742 = vmax.f32 %v1722, 0.0
  %v1743 = vld [vmem:[%s21] sm:$0xff]
  %v1744 = vld [vmem:[%s21 + $0x8] sm:$0xff]
  %v1745 = vld [vmem:[%s21 + $0x10] sm:$0xf]
  %v1749 = vlaneseq
  %v1750 = vshrl.u32 %v1749, 7
  %v1751 = vsub.s32 0, %v1750
  %v1752 = vrot.slane %v1743, %v1751
  %v1753 = vlaneseq
  %v1754 = vshrl.u32 %v1753, 7
  %v1755 = vsub.s32 1, %v1754
  %v1756 = vrot.slane %v1743, %v1755
  %v1757 = vlaneseq
  %v1758 = vshrl.u32 %v1757, 7
  %v1759 = vsub.s32 2, %v1758
  %v1760 = vrot.slane %v1743, %v1759
  %v1761 = vlaneseq
  %v1762 = vshrl.u32 %v1761, 7
  %v1763 = vsub.s32 3, %v1762
  %v1764 = vrot.slane %v1743, %v1763
  %v1765 = vlaneseq
  %v1766 = vshrl.u32 %v1765, 7
  %v1767 = vsub.s32 4, %v1766
  %v1768 = vrot.slane %v1743, %v1767
  %v1769 = vlaneseq
  %v1770 = vshrl.u32 %v1769, 7
  %v1771 = vsub.s32 5, %v1770
  %v1772 = vrot.slane %v1743, %v1771
  %v1773 = vlaneseq
  %v1774 = vshrl.u32 %v1773, 7
  %v1775 = vsub.s32 6, %v1774
  %v1776 = vrot.slane %v1743, %v1775
  %v1777 = vlaneseq
  %v1778 = vshrl.u32 %v1777, 7
  %v1779 = vsub.s32 7, %v1778
  %v1780 = vrot.slane %v1743, %v1779
  %v1781 = vlaneseq
  %v1782 = vshrl.u32 %v1781, 7
  %v1783 = vsub.s32 0, %v1782
  %v1784 = vrot.slane %v1744, %v1783
  %v1785 = vlaneseq
  %v1786 = vshrl.u32 %v1785, 7
  %v1787 = vsub.s32 1, %v1786
  %v1788 = vrot.slane %v1744, %v1787
  %v1789 = vlaneseq
  %v1790 = vshrl.u32 %v1789, 7
  %v1791 = vsub.s32 2, %v1790
  %v1792 = vrot.slane %v1744, %v1791
  %v1793 = vlaneseq
  %v1794 = vshrl.u32 %v1793, 7
  %v1795 = vsub.s32 3, %v1794
  %v1796 = vrot.slane %v1744, %v1795
  %v1797 = vlaneseq
  %v1798 = vshrl.u32 %v1797, 7
  %v1799 = vsub.s32 4, %v1798
  %v1800 = vrot.slane %v1744, %v1799
  %v1801 = vlaneseq
  %v1802 = vshrl.u32 %v1801, 7
  %v1803 = vsub.s32 5, %v1802
  %v1804 = vrot.slane %v1744, %v1803
  %v1805 = vlaneseq
  %v1806 = vshrl.u32 %v1805, 7
  %v1807 = vsub.s32 6, %v1806
  %v1808 = vrot.slane %v1744, %v1807
  %v1809 = vlaneseq
  %v1810 = vshrl.u32 %v1809, 7
  %v1811 = vsub.s32 7, %v1810
  %v1812 = vrot.slane %v1744, %v1811
  %v1813 = vlaneseq
  %v1814 = vshrl.u32 %v1813, 7
  %v1815 = vsub.s32 0, %v1814
  %v1816 = vrot.slane %v1745, %v1815
  %v1817 = vlaneseq
  %v1818 = vshrl.u32 %v1817, 7
  %v1819 = vsub.s32 1, %v1818
  %v1820 = vrot.slane %v1745, %v1819
  %v1821 = vlaneseq
  %v1822 = vshrl.u32 %v1821, 7
  %v1823 = vsub.s32 2, %v1822
  %v1824 = vrot.slane %v1745, %v1823
  %v1825 = vlaneseq
  %v1826 = vshrl.u32 %v1825, 7
  %v1827 = vsub.s32 3, %v1826
  %v1828 = vrot.slane %v1745, %v1827
  %v1849 = vmul.f32 %v1723, %v1752
  %v1850 = vmul.f32 %v1724, %v1756
  %v1851 = vmul.f32 %v1725, %v1760
  %v1852 = vmul.f32 %v1726, %v1764
  %v1853 = vmul.f32 %v1727, %v1768
  %v1854 = vmul.f32 %v1728, %v1772
  %v1855 = vmul.f32 %v1729, %v1776
  %v1856 = vmul.f32 %v1730, %v1780
  %v1857 = vmul.f32 %v1731, %v1784
  %v1858 = vmul.f32 %v1732, %v1788
  %v1859 = vmul.f32 %v1733, %v1792
  %v1860 = vmul.f32 %v1734, %v1796
  %v1861 = vmul.f32 %v1735, %v1800
  %v1862 = vmul.f32 %v1736, %v1804
  %v1863 = vmul.f32 %v1737, %v1808
  %v1864 = vmul.f32 %v1738, %v1812
  %v1865 = vmul.f32 %v1739, %v1816
  %v1866 = vmul.f32 %v1740, %v1820
  %v1867 = vmul.f32 %v1741, %v1824
  %v1868 = vmul.f32 %v1742, %v1828
  %v1869 = vld [vmem:[%s22] sm:$0x1]
  %v1870 = vadd.f32 %v1849, %v1850
  %v1871 = vadd.f32 %v1870, %v1851
  %v1872 = vadd.f32 %v1871, %v1852
  %1873 = vadd.xlane.f32.xlu0 %v1872
  %v1874 = vpop.xlane.xlu0 %1873
  %v1876 = vlaneseq
  %v1877 = vshrl.u32 %v1876, 7
  %v1878 = vsub.s32 0, %v1877
  %v1879 = vrot.slane %v1869, %v1878
  %v1881 = vadd.f32 %v1874, %v1879
  %v1882 = vsub.f32 0.0, %v1881
  %v1883 = vmul.f32 %v1882, 1.442695
  %v1884 = vpow.pop %v1883
  %v1885 = vadd.f32 %v1884, 1.0
  %v1886 = vrcp.pop %v1885
  %1888 = vrot.lane.b32.xlu0 %v1886, 1
  %v1889 = vpop.permute.xlu0 %1888
  %vm1891 = vcmask 15368
  %1892 = vst.msk [vmem:[%s23] sm:$0xff] %vm1891, %v1889
  %v1893 = vadd.f32 %v1853, %v1854
  %v1894 = vadd.f32 %v1893, %v1855
  %v1895 = vadd.f32 %v1894, %v1856
  %1896 = vadd.xlane.f32.xlu0 %v1895
  %v1897 = vpop.xlane.xlu0 %1896
  %v1898 = vadd.f32 %v1897, %v1879
  %v1899 = vsub.f32 0.0, %v1898
  %v1900 = vmul.f32 %v1899, 1.442695
  %v1901 = vpow.pop %v1900
  %v1902 = vadd.f32 %v1901, 1.0
  %v1903 = vrcp.pop %v1902
  %1905 = vrot.lane.b32.xlu0 %v1903, 1
  %v1906 = vpop.permute.xlu0 %1905
  %vm1908 = vcmask 23568
  %1909 = vst.msk [vmem:[%s23] sm:$0xff] %vm1908, %v1906
  %v1910 = vadd.f32 %v1857, %v1858
  %v1911 = vadd.f32 %v1910, %v1859
  %v1912 = vadd.f32 %v1911, %v1860
  %1913 = vadd.xlane.f32.xlu0 %v1912
  %v1914 = vpop.xlane.xlu0 %1913
  %v1915 = vadd.f32 %v1914, %v1879
  %v1916 = vsub.f32 0.0, %v1915
  %v1917 = vmul.f32 %v1916, 1.442695
  %v1918 = vpow.pop %v1917
  %v1919 = vadd.f32 %v1918, 1.0
  %v1920 = vrcp.pop %v1919
  %1922 = vrot.lane.b32.xlu0 %v1920, 1
  %v1923 = vpop.permute.xlu0 %1922
  %vm1925 = vcmask 31768
  %1926 = vst.msk [vmem:[%s23] sm:$0xff] %vm1925, %v1923
  %v1927 = vadd.f32 %v1861, %v1862
  %v1928 = vadd.f32 %v1927, %v1863
  %v1929 = vadd.f32 %v1928, %v1864
  %1930 = vadd.xlane.f32.xlu0 %v1929
  %v1931 = vpop.xlane.xlu0 %1930
  %v1932 = vadd.f32 %v1931, %v1879
  %v1933 = vsub.f32 0.0, %v1932
  %v1934 = vmul.f32 %v1933, 1.442695
  %v1935 = vpow.pop %v1934
  %v1936 = vadd.f32 %v1935, 1.0
  %v1937 = vrcp.pop %v1936
  %1939 = vrot.lane.b32.xlu0 %v1937, 1
  %v1940 = vpop.permute.xlu0 %1939
  %vm1942 = vcmask 39968
  %1943 = vst.msk [vmem:[%s23] sm:$0xff] %vm1942, %v1940
  %v1944 = vadd.f32 %v1865, %v1866
  %v1945 = vadd.f32 %v1944, %v1867
  %v1946 = vadd.f32 %v1945, %v1868
  %1947 = vadd.xlane.f32.xlu0 %v1946
  %v1948 = vpop.xlane.xlu0 %1947
  %v1949 = vadd.f32 %v1948, %v1879
  %v1950 = vsub.f32 0.0, %v1949
  %v1951 = vmul.f32 %v1950, 1.442695
  %v1952 = vpow.pop %v1951
  %v1953 = vadd.f32 %v1952, 1.0
  %v1954 = vrcp.pop %v1953
  %1956 = vrot.lane.b32.xlu0 %v1954, 1
  %v1957 = vpop.permute.xlu0 %1956
  %vm1959 = vcmask 48168
  %1960 = vst.msk [vmem:[%s23] sm:$0xff] %vm1959, %v1957
  // Predicated region
  $region94: #{irtnet_forward.1} parent=0 // pred_check
    _
  $region95: #{irtnet_forward.1} parent=0 // pred_check_branch
    %1962 = sbr.rel (0) target = $region97
  $region96: #{irtnet_forward.1} parent=0 // pred_region
    _
  $region97: #{irtnet_forward.1} parent=0 // pred_fallthru
    _
  // Predicated region
  $region98: #{irtnet_forward.1} parent=0 // pred_check
    _
  $region99: #{irtnet_forward.1} parent=0 // pred_check_branch
    %1964 = sbr.rel (0) target = $region101
  $region100: #{irtnet_forward.1} parent=0 // pred_region
    _
  $region101: #{irtnet_forward.1} parent=0 // pred_fallthru
    _

</llo_original>
